<compile_context>
chip_gen: v6e
topology: v6e:2x2x1
jax: 0.10.0
libtpu: 0.0.40
codegen_flags: <defaults>
</compile_context>

<pallas_src>
import jax
import jax.numpy as jnp
from jax.experimental import pallas as pl
from jax.experimental.pallas import tpu as pltpu


def _picture_encoding_kernel(x_ref, pos_ref, o_ref):
    """One grid step = (T patch rows, one batch element).

    x_ref  : (1, C, T, p, W)      lane-dense layout (primary), or
             (1, C, T, p, Wp, p)  padded layout (fallback)
    pos_ref: (1, T, Wp, D)        D = C*p*p, feature order (c, kh, kw)
    o_ref  : (1, T, Wp, D)
    """
    C = x_ref.shape[1]
    p = x_ref.shape[3]
    T, Wp = o_ref.shape[1], o_ref.shape[2]

    pieces = []
    for c in range(C):
        for kh in range(p):
            if len(x_ref.shape) == 5:
                # Lane-dense (T, W) load, then split lanes W -> (ow, kw).
                piece = x_ref[0, c, :, kh, :].reshape(T, Wp, p)
            else:
                # Padded fallback layout: slab is already (T, Wp, p).
                piece = x_ref[0, c, :, kh, :, :]
            pieces.append(piece)
    # Feature axis assembled in (c, kh, kw) order == F.unfold's channel ordering.
    patches = jnp.concatenate(pieces, axis=-1)            # (T, Wp, D)
    o_ref[0] = (patches + pos_ref[0]).astype(o_ref.dtype)  # one full-block store


def _round_up(v, m):
    return -(-v // m) * m


def _largest_divisor_at_most(n, cap):
    cap = max(1, min(n, cap))
    while n % cap:
        cap -= 1
    return cap


def picture_encoding(x, pos_emb, patch_size):
    """Pallas implementation of PictureEncoding.forward (F.unfold + positional add)."""
    B, C, H, W = x.shape
    p = patch_size
    assert H % p == 0 and W % p == 0
    Hp, Wp = H // p, W // p
    L, D = Hp * Wp, C * p * p
    assert pos_emb.shape == (1, L, D)

    # Pre-cast pos_emb to the activation dtype (saves DMA/VMEM + VPU casts for bf16).
    pos4 = pos_emb.astype(x.dtype).reshape(1, Hp, Wp, D)          # (1, oh, ow, d)

    itemsize = jnp.dtype(x.dtype).itemsize
    sublane = max(8, 8 * (4 // max(itemsize, 1)))                  # 8 f32 / 16 bf16 / 32 int8

    # Generation-aware VMEM budget: 128 MiB on v5e/v6e, 64 MiB per TensorCore on v7x.
    try:
        vmem_cap = int(getattr(pltpu.get_tpu_info(), "vmem_capacity_bytes", 64 << 20))
    except Exception:
        vmem_cap = 64 << 20                                        # conservative default
    vmem_limit = int(min(max(vmem_cap // 2, 16 << 20), 64 << 20))  # 64 MiB v5e/v6e, 32 MiB v7x
    step_budget = vmem_limit // 2

    # Padded per-patch-row VMEM bytes (everything below scales linearly with T):
    # pos/out blocks (double-buffered), relayouted (c,kh) slabs, concat/add result.
    posout_row = _round_up(Wp, sublane) * _round_up(D, 128) * itemsize
    relayout_row = C * p * _round_up(Wp, sublane) * _round_up(p, 128) * itemsize
    common_row = relayout_row + 2 * posout_row + 2 * (2 * posout_row)
    x_dense_row = 2 * C * _round_up(p, sublane) * _round_up(W, 128) * itemsize          # x2 buffers
    x_padded_row = 2 * C * p * _round_up(Wp, sublane) * _round_up(p, 128) * itemsize    # x2 buffers

    def _pick_rows(per_row_bytes):
        t = _largest_divisor_at_most(Hp, max(1, step_budget // max(per_row_bytes, 1)))
        # Keep >=2 grid steps so both v7x TensorCores (and the pipeline) get work.
        if (Hp // t) * B < 2 and Hp > 1:
            t = _largest_divisor_at_most(Hp, max(1, Hp // 2))
        return t

    params = pltpu.CompilerParams(
        dimension_semantics=("parallel", "parallel"),
        vmem_limit_bytes=vmem_limit,
    )
    out_shape = jax.ShapeDtypeStruct((B, Hp, Wp, D), x.dtype)

    def _call_lane_dense():
        T = _pick_rows(common_row + x_dense_row)
        x5 = x.reshape(B, C, Hp, p, W)                 # free contiguous view of NCHW
        return pl.pallas_call(
            _picture_encoding_kernel,
            out_shape=out_shape,
            grid=(Hp // T, B),                         # batch innermost: pos block reused
            in_specs=[
                pl.BlockSpec((1, C, T, p, W), lambda i, b: (b, 0, i, 0, 0)),
                pl.BlockSpec((1, T, Wp, D), lambda i, b: (0, i, 0, 0)),
            ],
            out_specs=pl.BlockSpec((1, T, Wp, D), lambda i, b: (b, i, 0, 0)),
            compiler_params=params,
        )(x5, pos4)

    def _call_padded():
        T = _pick_rows(common_row + x_padded_row)
        x6 = x.reshape(B, C, Hp, p, Wp, p)             # free contiguous view of NCHW
        return pl.pallas_call(
            _picture_encoding_kernel,
            out_shape=out_shape,
            grid=(Hp // T, B),
            in_specs=[
                pl.BlockSpec((1, C, T, p, Wp, p), lambda i, b: (b, 0, i, 0, 0, 0)),
                pl.BlockSpec((1, T, Wp, D), lambda i, b: (0, i, 0, 0)),
            ],
            out_specs=pl.BlockSpec((1, T, Wp, D), lambda i, b: (b, i, 0, 0)),
            compiler_params=params,
        )(x6, pos4)

    # Prefer the lane-dense x layout; if this Mosaic toolchain rejects the in-kernel
    # lane-splitting reshape, fall back to the (previously validated) padded layout.
    # (Adaptive selection assumes eager invocation, as in this script.)
    try:
        out4 = jax.block_until_ready(_call_lane_dense())
    except Exception:
        out4 = _call_padded()

    # Contiguous glue reshape: (b, oh, ow, d) -> (b, oh*Wp + ow, d).
    return out4.reshape(B, L, D)


def _reference(x, pos_emb, patch_size):
    # Pure-JAX reference of the PyTorch forward (F.unfold + permute + pos add).
    B, C, H, W = x.shape
    p = patch_size
    Hp, Wp = H // p, W // p
    patches = x.reshape(B, C, Hp, p, Wp, p)
    patches = jnp.transpose(patches, (0, 2, 4, 1, 3, 5)).reshape(B, Hp * Wp, C * p * p)
    return patches + pos_emb


if __name__ == "__main__":
    # Small shapes consistent with the module: B=2, C=4, H=W=16, patch=4
    # -> num_patches L = 16, d_model D = C*p*p = 64.
    B, C, H, W, P = 2, 4, 16, 16, 4
    L, D = (H // P) * (W // P), C * P * P

    key = jax.random.PRNGKey(0)
    kx, kp = jax.random.split(key)
    x = jax.random.normal(kx, (B, C, H, W), dtype=jnp.float32)
    # nn.Parameter(torch.randn(1, num_patches, d_model)) -> deterministic normal init
    pos_emb = jax.random.normal(kp, (1, L, D), dtype=jnp.float32)

    out = picture_encoding(x, pos_emb, P)
    out = jax.block_until_ready(out)

    ref = _reference(x, pos_emb, P)
    assert out.shape == (B, L, D), out.shape
    assert jnp.allclose(out, ref, atol=1e-5, rtol=1e-5), "mismatch vs reference"

    # TODO(synk): nn.Dropout(drop_prob) exists in __init__ but is never called in
    # forward(), so no dropout is applied here.
    print("KERNEL_OK")
</pallas_src>

<mosaic_0001>
module attributes {stable_mosaic.version = 11 : i64} {
  func.func @_picture_encoding_kernel(%arg0: i32, %arg1: i32, %arg2: memref<1x4x4x4x16xf32, #tpu.memory_space<vmem>>, %arg3: memref<1x4x4x64xf32, #tpu.memory_space<vmem>>, %arg4: memref<1x4x4x64xf32, #tpu.memory_space<vmem>>) attributes {dimension_semantics = [#tpu.dimension_semantics<parallel>, #tpu.dimension_semantics<parallel>], iteration_bounds = array<i64: 1, 2>, scalar_prefetch = 0 : i64, scratch_operands = 0 : i64, tpu.core_type = #tpu.core_type<tc>, window_params = [{transform_indices = @transform_0, window_bounds = array<i64: 1, 4, 4, 4, 16>}, {transform_indices = @transform_1, window_bounds = array<i64: 1, 4, 4, 64>}, {transform_indices = @transform_2, window_bounds = array<i64: 1, 4, 4, 64>}]} {
    %c0 = arith.constant 0 : index
    %c0_0 = arith.constant 0 : index
    %c0_1 = arith.constant 0 : index
    %c0_2 = arith.constant 0 : index
    %c0_3 = arith.constant 0 : index
    %0 = vector.load %arg2[%c0, %c0_0, %c0_1, %c0_2, %c0_3] : memref<1x4x4x4x16xf32, #tpu.memory_space<vmem>>, vector<1x1x4x1x16xf32>
    %1 = vector.shape_cast %0 : vector<1x1x4x1x16xf32> to vector<4x16xf32>
    %2 = vector.shape_cast %1 : vector<4x16xf32> to vector<4x4x4xf32>
    %c0_4 = arith.constant 0 : index
    %c0_5 = arith.constant 0 : index
    %c0_6 = arith.constant 0 : index
    %c1 = arith.constant 1 : index
    %c0_7 = arith.constant 0 : index
    %3 = vector.load %arg2[%c0_4, %c0_5, %c0_6, %c1, %c0_7] : memref<1x4x4x4x16xf32, #tpu.memory_space<vmem>>, vector<1x1x4x1x16xf32>
    %4 = vector.shape_cast %3 : vector<1x1x4x1x16xf32> to vector<4x16xf32>
    %5 = vector.shape_cast %4 : vector<4x16xf32> to vector<4x4x4xf32>
    %c0_8 = arith.constant 0 : index
    %c0_9 = arith.constant 0 : index
    %c0_10 = arith.constant 0 : index
    %c2 = arith.constant 2 : index
    %c0_11 = arith.constant 0 : index
    %6 = vector.load %arg2[%c0_8, %c0_9, %c0_10, %c2, %c0_11] : memref<1x4x4x4x16xf32, #tpu.memory_space<vmem>>, vector<1x1x4x1x16xf32>
    %7 = vector.shape_cast %6 : vector<1x1x4x1x16xf32> to vector<4x16xf32>
    %8 = vector.shape_cast %7 : vector<4x16xf32> to vector<4x4x4xf32>
    %c0_12 = arith.constant 0 : index
    %c0_13 = arith.constant 0 : index
    %c0_14 = arith.constant 0 : index
    %c3 = arith.constant 3 : index
    %c0_15 = arith.constant 0 : index
    %9 = vector.load %arg2[%c0_12, %c0_13, %c0_14, %c3, %c0_15] : memref<1x4x4x4x16xf32, #tpu.memory_space<vmem>>, vector<1x1x4x1x16xf32>
    %10 = vector.shape_cast %9 : vector<1x1x4x1x16xf32> to vector<4x16xf32>
    %11 = vector.shape_cast %10 : vector<4x16xf32> to vector<4x4x4xf32>
    %c0_16 = arith.constant 0 : index
    %c1_17 = arith.constant 1 : index
    %c0_18 = arith.constant 0 : index
    %c0_19 = arith.constant 0 : index
    %c0_20 = arith.constant 0 : index
    %12 = vector.load %arg2[%c0_16, %c1_17, %c0_18, %c0_19, %c0_20] : memref<1x4x4x4x16xf32, #tpu.memory_space<vmem>>, vector<1x1x4x1x16xf32>
    %13 = vector.shape_cast %12 : vector<1x1x4x1x16xf32> to vector<4x16xf32>
    %14 = vector.shape_cast %13 : vector<4x16xf32> to vector<4x4x4xf32>
    %c0_21 = arith.constant 0 : index
    %c1_22 = arith.constant 1 : index
    %c0_23 = arith.constant 0 : index
    %c1_24 = arith.constant 1 : index
    %c0_25 = arith.constant 0 : index
    %15 = vector.load %arg2[%c0_21, %c1_22, %c0_23, %c1_24, %c0_25] : memref<1x4x4x4x16xf32, #tpu.memory_space<vmem>>, vector<1x1x4x1x16xf32>
    %16 = vector.shape_cast %15 : vector<1x1x4x1x16xf32> to vector<4x16xf32>
    %17 = vector.shape_cast %16 : vector<4x16xf32> to vector<4x4x4xf32>
    %c0_26 = arith.constant 0 : index
    %c1_27 = arith.constant 1 : index
    %c0_28 = arith.constant 0 : index
    %c2_29 = arith.constant 2 : index
    %c0_30 = arith.constant 0 : index
    %18 = vector.load %arg2[%c0_26, %c1_27, %c0_28, %c2_29, %c0_30] : memref<1x4x4x4x16xf32, #tpu.memory_space<vmem>>, vector<1x1x4x1x16xf32>
    %19 = vector.shape_cast %18 : vector<1x1x4x1x16xf32> to vector<4x16xf32>
    %20 = vector.shape_cast %19 : vector<4x16xf32> to vector<4x4x4xf32>
    %c0_31 = arith.constant 0 : index
    %c1_32 = arith.constant 1 : index
    %c0_33 = arith.constant 0 : index
    %c3_34 = arith.constant 3 : index
    %c0_35 = arith.constant 0 : index
    %21 = vector.load %arg2[%c0_31, %c1_32, %c0_33, %c3_34, %c0_35] : memref<1x4x4x4x16xf32, #tpu.memory_space<vmem>>, vector<1x1x4x1x16xf32>
    %22 = vector.shape_cast %21 : vector<1x1x4x1x16xf32> to vector<4x16xf32>
    %23 = vector.shape_cast %22 : vector<4x16xf32> to vector<4x4x4xf32>
    %c0_36 = arith.constant 0 : index
    %c2_37 = arith.constant 2 : index
    %c0_38 = arith.constant 0 : index
    %c0_39 = arith.constant 0 : index
    %c0_40 = arith.constant 0 : index
    %24 = vector.load %arg2[%c0_36, %c2_37, %c0_38, %c0_39, %c0_40] : memref<1x4x4x4x16xf32, #tpu.memory_space<vmem>>, vector<1x1x4x1x16xf32>
    %25 = vector.shape_cast %24 : vector<1x1x4x1x16xf32> to vector<4x16xf32>
    %26 = vector.shape_cast %25 : vector<4x16xf32> to vector<4x4x4xf32>
    %c0_41 = arith.constant 0 : index
    %c2_42 = arith.constant 2 : index
    %c0_43 = arith.constant 0 : index
    %c1_44 = arith.constant 1 : index
    %c0_45 = arith.constant 0 : index
    %27 = vector.load %arg2[%c0_41, %c2_42, %c0_43, %c1_44, %c0_45] : memref<1x4x4x4x16xf32, #tpu.memory_space<vmem>>, vector<1x1x4x1x16xf32>
    %28 = vector.shape_cast %27 : vector<1x1x4x1x16xf32> to vector<4x16xf32>
    %29 = vector.shape_cast %28 : vector<4x16xf32> to vector<4x4x4xf32>
    %c0_46 = arith.constant 0 : index
    %c2_47 = arith.constant 2 : index
    %c0_48 = arith.constant 0 : index
    %c2_49 = arith.constant 2 : index
    %c0_50 = arith.constant 0 : index
    %30 = vector.load %arg2[%c0_46, %c2_47, %c0_48, %c2_49, %c0_50] : memref<1x4x4x4x16xf32, #tpu.memory_space<vmem>>, vector<1x1x4x1x16xf32>
    %31 = vector.shape_cast %30 : vector<1x1x4x1x16xf32> to vector<4x16xf32>
    %32 = vector.shape_cast %31 : vector<4x16xf32> to vector<4x4x4xf32>
    %c0_51 = arith.constant 0 : index
    %c2_52 = arith.constant 2 : index
    %c0_53 = arith.constant 0 : index
    %c3_54 = arith.constant 3 : index
    %c0_55 = arith.constant 0 : index
    %33 = vector.load %arg2[%c0_51, %c2_52, %c0_53, %c3_54, %c0_55] : memref<1x4x4x4x16xf32, #tpu.memory_space<vmem>>, vector<1x1x4x1x16xf32>
    %34 = vector.shape_cast %33 : vector<1x1x4x1x16xf32> to vector<4x16xf32>
    %35 = vector.shape_cast %34 : vector<4x16xf32> to vector<4x4x4xf32>
    %c0_56 = arith.constant 0 : index
    %c3_57 = arith.constant 3 : index
    %c0_58 = arith.constant 0 : index
    %c0_59 = arith.constant 0 : index
    %c0_60 = arith.constant 0 : index
    %36 = vector.load %arg2[%c0_56, %c3_57, %c0_58, %c0_59, %c0_60] : memref<1x4x4x4x16xf32, #tpu.memory_space<vmem>>, vector<1x1x4x1x16xf32>
    %37 = vector.shape_cast %36 : vector<1x1x4x1x16xf32> to vector<4x16xf32>
    %38 = vector.shape_cast %37 : vector<4x16xf32> to vector<4x4x4xf32>
    %c0_61 = arith.constant 0 : index
    %c3_62 = arith.constant 3 : index
    %c0_63 = arith.constant 0 : index
    %c1_64 = arith.constant 1 : index
    %c0_65 = arith.constant 0 : index
    %39 = vector.load %arg2[%c0_61, %c3_62, %c0_63, %c1_64, %c0_65] : memref<1x4x4x4x16xf32, #tpu.memory_space<vmem>>, vector<1x1x4x1x16xf32>
    %40 = vector.shape_cast %39 : vector<1x1x4x1x16xf32> to vector<4x16xf32>
    %41 = vector.shape_cast %40 : vector<4x16xf32> to vector<4x4x4xf32>
    %c0_66 = arith.constant 0 : index
    %c3_67 = arith.constant 3 : index
    %c0_68 = arith.constant 0 : index
    %c2_69 = arith.constant 2 : index
    %c0_70 = arith.constant 0 : index
    %42 = vector.load %arg2[%c0_66, %c3_67, %c0_68, %c2_69, %c0_70] : memref<1x4x4x4x16xf32, #tpu.memory_space<vmem>>, vector<1x1x4x1x16xf32>
    %43 = vector.shape_cast %42 : vector<1x1x4x1x16xf32> to vector<4x16xf32>
    %44 = vector.shape_cast %43 : vector<4x16xf32> to vector<4x4x4xf32>
    %c0_71 = arith.constant 0 : index
    %c3_72 = arith.constant 3 : index
    %c0_73 = arith.constant 0 : index
    %c3_74 = arith.constant 3 : index
    %c0_75 = arith.constant 0 : index
    %45 = vector.load %arg2[%c0_71, %c3_72, %c0_73, %c3_74, %c0_75] : memref<1x4x4x4x16xf32, #tpu.memory_space<vmem>>, vector<1x1x4x1x16xf32>
    %46 = vector.shape_cast %45 : vector<1x1x4x1x16xf32> to vector<4x16xf32>
    %47 = vector.shape_cast %46 : vector<4x16xf32> to vector<4x4x4xf32>
    %48 = tpu.concatenate %2, %5, %8, %11, %14, %17, %20, %23, %26, %29, %32, %35, %38, %41, %44, %47 in 2 : vector<4x4x4xf32>, vector<4x4x4xf32>, vector<4x4x4xf32>, vector<4x4x4xf32>, vector<4x4x4xf32>, vector<4x4x4xf32>, vector<4x4x4xf32>, vector<4x4x4xf32>, vector<4x4x4xf32>, vector<4x4x4xf32>, vector<4x4x4xf32>, vector<4x4x4xf32>, vector<4x4x4xf32>, vector<4x4x4xf32>, vector<4x4x4xf32>, vector<4x4x4xf32> -> vector<4x4x64xf32>
    %c0_76 = arith.constant 0 : index
    %c0_77 = arith.constant 0 : index
    %c0_78 = arith.constant 0 : index
    %c0_79 = arith.constant 0 : index
    %49 = vector.load %arg3[%c0_76, %c0_77, %c0_78, %c0_79] : memref<1x4x4x64xf32, #tpu.memory_space<vmem>>, vector<1x4x4x64xf32>
    %50 = vector.shape_cast %49 : vector<1x4x4x64xf32> to vector<4x4x64xf32>
    %51 = arith.addf %48, %50 : vector<4x4x64xf32>
    %c0_80 = arith.constant 0 : index
    %c0_81 = arith.constant 0 : index
    %c0_82 = arith.constant 0 : index
    %c0_83 = arith.constant 0 : index
    %52 = vector.load %arg4[%c0_80, %c0_81, %c0_82, %c0_83] : memref<1x4x4x64xf32, #tpu.memory_space<vmem>>, vector<1x4x4x64xf32>
    %53 = vector.shape_cast %52 : vector<1x4x4x64xf32> to vector<4x4x64xf32>
    %54 = vector.shape_cast %51 : vector<4x4x64xf32> to vector<1x4x4x64xf32>
    tpu.vector_store %arg4[%c0_80, %c0_81, %c0_82, %c0_83], %54 {strides = array<i32>} : memref<1x4x4x64xf32, #tpu.memory_space<vmem>>, vector<1x4x4x64xf32>,
    return
  }
  func.func @transform_0(%arg0: i32, %arg1: i32) -> (i32, i32, i32, i32, i32) {
    %c0_i32 = arith.constant 0 : i32
    %c0_i32_0 = arith.constant 0 : i32
    %c0_i32_1 = arith.constant 0 : i32
    %c0_i32_2 = arith.constant 0 : i32
    return %arg1, %c0_i32, %arg0, %c0_i32_0, %c0_i32_1 : i32, i32, i32, i32, i32
  }
  func.func @transform_1(%arg0: i32, %arg1: i32) -> (i32, i32, i32, i32) {
    %c0_i32 = arith.constant 0 : i32
    %c0_i32_0 = arith.constant 0 : i32
    %c0_i32_1 = arith.constant 0 : i32
    %c0_i32_2 = arith.constant 0 : i32
    return %c0_i32, %arg0, %c0_i32_0, %c0_i32_1 : i32, i32, i32, i32
  }
  func.func @transform_2(%arg0: i32, %arg1: i32) -> (i32, i32, i32, i32) {
    %c0_i32 = arith.constant 0 : i32
    %c0_i32_0 = arith.constant 0 : i32
    %c0_i32_1 = arith.constant 0 : i32
    return %arg1, %arg0, %c0_i32, %c0_i32_0 : i32, i32, i32, i32
  }
}

module attributes {stable_mosaic.version = 11 : i64} {
  func.func @_picture_encoding_kernel(%arg0: i32, %arg1: i32, %arg2: memref<1x4x4x4x4x4xf32, #tpu.memory_space<vmem>>, %arg3: memref<1x4x4x64xf32, #tpu.memory_space<vmem>>, %arg4: memref<1x4x4x64xf32, #tpu.memory_space<vmem>>) attributes {dimension_semantics = [#tpu.dimension_semantics<parallel>, #tpu.dimension_semantics<parallel>], iteration_bounds = array<i64: 1, 2>, scalar_prefetch = 0 : i64, scratch_operands = 0 : i64, tpu.core_type = #tpu.core_type<tc>, window_params = [{transform_indices = @transform_0, window_bounds = array<i64: 1, 4, 4, 4, 4, 4>}, {transform_indices = @transform_1, window_bounds = array<i64: 1, 4, 4, 64>}, {transform_indices = @transform_2, window_bounds = array<i64: 1, 4, 4, 64>}]} {
    %c0 = arith.constant 0 : index
    %c0_0 = arith.constant 0 : index
    %c0_1 = arith.constant 0 : index
    %c0_2 = arith.constant 0 : index
    %c0_3 = arith.constant 0 : index
    %c0_4 = arith.constant 0 : index
    %0 = vector.load %arg2[%c0, %c0_0, %c0_1, %c0_2, %c0_3, %c0_4] : memref<1x4x4x4x4x4xf32, #tpu.memory_space<vmem>>, vector<1x1x4x1x4x4xf32>
    %1 = vector.shape_cast %0 : vector<1x1x4x1x4x4xf32> to vector<4x4x4xf32>
    %c0_5 = arith.constant 0 : index
    %c0_6 = arith.constant 0 : index
    %c0_7 = arith.constant 0 : index
    %c1 = arith.constant 1 : index
    %c0_8 = arith.constant 0 : index
    %c0_9 = arith.constant 0 : index
    %2 = vector.load %arg2[%c0_5, %c0_6, %c0_7, %c1, %c0_8, %c0_9] : memref<1x4x4x4x4x4xf32, #tpu.memory_space<vmem>>, vector<1x1x4x1x4x4xf32>
    %3 = vector.shape_cast %2 : vector<1x1x4x1x4x4xf32> to vector<4x4x4xf32>
    %c0_10 = arith.constant 0 : index
    %c0_11 = arith.constant 0 : index
    %c0_12 = arith.constant 0 : index
    %c2 = arith.constant 2 : index
    %c0_13 = arith.constant 0 : index
    %c0_14 = arith.constant 0 : index
    %4 = vector.load %arg2[%c0_10, %c0_11, %c0_12, %c2, %c0_13, %c0_14] : memref<1x4x4x4x4x4xf32, #tpu.memory_space<vmem>>, vector<1x1x4x1x4x4xf32>
    %5 = vector.shape_cast %4 : vector<1x1x4x1x4x4xf32> to vector<4x4x4xf32>
    %c0_15 = arith.constant 0 : index
    %c0_16 = arith.constant 0 : index
    %c0_17 = arith.constant 0 : index
    %c3 = arith.constant 3 : index
    %c0_18 = arith.constant 0 : index
    %c0_19 = arith.constant 0 : index
    %6 = vector.load %arg2[%c0_15, %c0_16, %c0_17, %c3, %c0_18, %c0_19] : memref<1x4x4x4x4x4xf32, #tpu.memory_space<vmem>>, vector<1x1x4x1x4x4xf32>
    %7 = vector.shape_cast %6 : vector<1x1x4x1x4x4xf32> to vector<4x4x4xf32>
    %c0_20 = arith.constant 0 : index
    %c1_21 = arith.constant 1 : index
    %c0_22 = arith.constant 0 : index
    %c0_23 = arith.constant 0 : index
    %c0_24 = arith.constant 0 : index
    %c0_25 = arith.constant 0 : index
    %8 = vector.load %arg2[%c0_20, %c1_21, %c0_22, %c0_23, %c0_24, %c0_25] : memref<1x4x4x4x4x4xf32, #tpu.memory_space<vmem>>, vector<1x1x4x1x4x4xf32>
    %9 = vector.shape_cast %8 : vector<1x1x4x1x4x4xf32> to vector<4x4x4xf32>
    %c0_26 = arith.constant 0 : index
    %c1_27 = arith.constant 1 : index
    %c0_28 = arith.constant 0 : index
    %c1_29 = arith.constant 1 : index
    %c0_30 = arith.constant 0 : index
    %c0_31 = arith.constant 0 : index
    %10 = vector.load %arg2[%c0_26, %c1_27, %c0_28, %c1_29, %c0_30, %c0_31] : memref<1x4x4x4x4x4xf32, #tpu.memory_space<vmem>>, vector<1x1x4x1x4x4xf32>
    %11 = vector.shape_cast %10 : vector<1x1x4x1x4x4xf32> to vector<4x4x4xf32>
    %c0_32 = arith.constant 0 : index
    %c1_33 = arith.constant 1 : index
    %c0_34 = arith.constant 0 : index
    %c2_35 = arith.constant 2 : index
    %c0_36 = arith.constant 0 : index
    %c0_37 = arith.constant 0 : index
    %12 = vector.load %arg2[%c0_32, %c1_33, %c0_34, %c2_35, %c0_36, %c0_37] : memref<1x4x4x4x4x4xf32, #tpu.memory_space<vmem>>, vector<1x1x4x1x4x4xf32>
    %13 = vector.shape_cast %12 : vector<1x1x4x1x4x4xf32> to vector<4x4x4xf32>
    %c0_38 = arith.constant 0 : index
    %c1_39 = arith.constant 1 : index
    %c0_40 = arith.constant 0 : index
    %c3_41 = arith.constant 3 : index
    %c0_42 = arith.constant 0 : index
    %c0_43 = arith.constant 0 : index
    %14 = vector.load %arg2[%c0_38, %c1_39, %c0_40, %c3_41, %c0_42, %c0_43] : memref<1x4x4x4x4x4xf32, #tpu.memory_space<vmem>>, vector<1x1x4x1x4x4xf32>
    %15 = vector.shape_cast %14 : vector<1x1x4x1x4x4xf32> to vector<4x4x4xf32>
    %c0_44 = arith.constant 0 : index
    %c2_45 = arith.constant 2 : index
    %c0_46 = arith.constant 0 : index
    %c0_47 = arith.constant 0 : index
    %c0_48 = arith.constant 0 : index
    %c0_49 = arith.constant 0 : index
    %16 = vector.load %arg2[%c0_44, %c2_45, %c0_46, %c0_47, %c0_48, %c0_49] : memref<1x4x4x4x4x4xf32, #tpu.memory_space<vmem>>, vector<1x1x4x1x4x4xf32>
    %17 = vector.shape_cast %16 : vector<1x1x4x1x4x4xf32> to vector<4x4x4xf32>
    %c0_50 = arith.constant 0 : index
    %c2_51 = arith.constant 2 : index
    %c0_52 = arith.constant 0 : index
    %c1_53 = arith.constant 1 : index
    %c0_54 = arith.constant 0 : index
    %c0_55 = arith.constant 0 : index
    %18 = vector.load %arg2[%c0_50, %c2_51, %c0_52, %c1_53, %c0_54, %c0_55] : memref<1x4x4x4x4x4xf32, #tpu.memory_space<vmem>>, vector<1x1x4x1x4x4xf32>
    %19 = vector.shape_cast %18 : vector<1x1x4x1x4x4xf32> to vector<4x4x4xf32>
    %c0_56 = arith.constant 0 : index
    %c2_57 = arith.constant 2 : index
    %c0_58 = arith.constant 0 : index
    %c2_59 = arith.constant 2 : index
    %c0_60 = arith.constant 0 : index
    %c0_61 = arith.constant 0 : index
    %20 = vector.load %arg2[%c0_56, %c2_57, %c0_58, %c2_59, %c0_60, %c0_61] : memref<1x4x4x4x4x4xf32, #tpu.memory_space<vmem>>, vector<1x1x4x1x4x4xf32>
    %21 = vector.shape_cast %20 : vector<1x1x4x1x4x4xf32> to vector<4x4x4xf32>
    %c0_62 = arith.constant 0 : index
    %c2_63 = arith.constant 2 : index
    %c0_64 = arith.constant 0 : index
    %c3_65 = arith.constant 3 : index
    %c0_66 = arith.constant 0 : index
    %c0_67 = arith.constant 0 : index
    %22 = vector.load %arg2[%c0_62, %c2_63, %c0_64, %c3_65, %c0_66, %c0_67] : memref<1x4x4x4x4x4xf32, #tpu.memory_space<vmem>>, vector<1x1x4x1x4x4xf32>
    %23 = vector.shape_cast %22 : vector<1x1x4x1x4x4xf32> to vector<4x4x4xf32>
    %c0_68 = arith.constant 0 : index
    %c3_69 = arith.constant 3 : index
    %c0_70 = arith.constant 0 : index
    %c0_71 = arith.constant 0 : index
    %c0_72 = arith.constant 0 : index
    %c0_73 = arith.constant 0 : index
    %24 = vector.load %arg2[%c0_68, %c3_69, %c0_70, %c0_71, %c0_72, %c0_73] : memref<1x4x4x4x4x4xf32, #tpu.memory_space<vmem>>, vector<1x1x4x1x4x4xf32>
    %25 = vector.shape_cast %24 : vector<1x1x4x1x4x4xf32> to vector<4x4x4xf32>
    %c0_74 = arith.constant 0 : index
    %c3_75 = arith.constant 3 : index
    %c0_76 = arith.constant 0 : index
    %c1_77 = arith.constant 1 : index
    %c0_78 = arith.constant 0 : index
    %c0_79 = arith.constant 0 : index
    %26 = vector.load %arg2[%c0_74, %c3_75, %c0_76, %c1_77, %c0_78, %c0_79] : memref<1x4x4x4x4x4xf32, #tpu.memory_space<vmem>>, vector<1x1x4x1x4x4xf32>
    %27 = vector.shape_cast %26 : vector<1x1x4x1x4x4xf32> to vector<4x4x4xf32>
    %c0_80 = arith.constant 0 : index
    %c3_81 = arith.constant 3 : index
    %c0_82 = arith.constant 0 : index
    %c2_83 = arith.constant 2 : index
    %c0_84 = arith.constant 0 : index
    %c0_85 = arith.constant 0 : index
    %28 = vector.load %arg2[%c0_80, %c3_81, %c0_82, %c2_83, %c0_84, %c0_85] : memref<1x4x4x4x4x4xf32, #tpu.memory_space<vmem>>, vector<1x1x4x1x4x4xf32>
    %29 = vector.shape_cast %28 : vector<1x1x4x1x4x4xf32> to vector<4x4x4xf32>
    %c0_86 = arith.constant 0 : index
    %c3_87 = arith.constant 3 : index
    %c0_88 = arith.constant 0 : index
    %c3_89 = arith.constant 3 : index
    %c0_90 = arith.constant 0 : index
    %c0_91 = arith.constant 0 : index
    %30 = vector.load %arg2[%c0_86, %c3_87, %c0_88, %c3_89, %c0_90, %c0_91] : memref<1x4x4x4x4x4xf32, #tpu.memory_space<vmem>>, vector<1x1x4x1x4x4xf32>
    %31 = vector.shape_cast %30 : vector<1x1x4x1x4x4xf32> to vector<4x4x4xf32>
    %32 = tpu.concatenate %1, %3, %5, %7, %9, %11, %13, %15, %17, %19, %21, %23, %25, %27, %29, %31 in 2 : vector<4x4x4xf32>, vector<4x4x4xf32>, vector<4x4x4xf32>, vector<4x4x4xf32>, vector<4x4x4xf32>, vector<4x4x4xf32>, vector<4x4x4xf32>, vector<4x4x4xf32>, vector<4x4x4xf32>, vector<4x4x4xf32>, vector<4x4x4xf32>, vector<4x4x4xf32>, vector<4x4x4xf32>, vector<4x4x4xf32>, vector<4x4x4xf32>, vector<4x4x4xf32> -> vector<4x4x64xf32>
    %c0_92 = arith.constant 0 : index
    %c0_93 = arith.constant 0 : index
    %c0_94 = arith.constant 0 : index
    %c0_95 = arith.constant 0 : index
    %33 = vector.load %arg3[%c0_92, %c0_93, %c0_94, %c0_95] : memref<1x4x4x64xf32, #tpu.memory_space<vmem>>, vector<1x4x4x64xf32>
    %34 = vector.shape_cast %33 : vector<1x4x4x64xf32> to vector<4x4x64xf32>
    %35 = arith.addf %32, %34 : vector<4x4x64xf32>
    %c0_96 = arith.constant 0 : index
    %c0_97 = arith.constant 0 : index
    %c0_98 = arith.constant 0 : index
    %c0_99 = arith.constant 0 : index
    %36 = vector.load %arg4[%c0_96, %c0_97, %c0_98, %c0_99] : memref<1x4x4x64xf32, #tpu.memory_space<vmem>>, vector<1x4x4x64xf32>
    %37 = vector.shape_cast %36 : vector<1x4x4x64xf32> to vector<4x4x64xf32>
    %38 = vector.shape_cast %35 : vector<4x4x64xf32> to vector<1x4x4x64xf32>
    tpu.vector_store %arg4[%c0_96, %c0_97, %c0_98, %c0_99], %38 {strides = array<i32>} : memref<1x4x4x64xf32, #tpu.memory_space<vmem>>, vector<1x4x4x64xf32>,
    return
  }
  func.func @transform_0(%arg0: i32, %arg1: i32) -> (i32, i32, i32, i32, i32, i32) {
    %c0_i32 = arith.constant 0 : i32
    %c0_i32_0 = arith.constant 0 : i32
    %c0_i32_1 = arith.constant 0 : i32
    %c0_i32_2 = arith.constant 0 : i32
    %c0_i32_3 = arith.constant 0 : i32
    return %arg1, %c0_i32, %arg0, %c0_i32_0, %c0_i32_1, %c0_i32_2 : i32, i32, i32, i32, i32, i32
  }
  func.func @transform_1(%arg0: i32, %arg1: i32) -> (i32, i32, i32, i32) {
    %c0_i32 = arith.constant 0 : i32
    %c0_i32_0 = arith.constant 0 : i32
    %c0_i32_1 = arith.constant 0 : i32
    %c0_i32_2 = arith.constant 0 : i32
    return %c0_i32, %arg0, %c0_i32_0, %c0_i32_1 : i32, i32, i32, i32
  }
  func.func @transform_2(%arg0: i32, %arg1: i32) -> (i32, i32, i32, i32) {
    %c0_i32 = arith.constant 0 : i32
    %c0_i32_0 = arith.constant 0 : i32
    %c0_i32_1 = arith.constant 0 : i32
    return %arg1, %arg0, %c0_i32, %c0_i32_0 : i32, i32, i32, i32
  }
}

</mosaic_0001>

<llo_original>
// kernel: tpu_custom_call.1
$region0: #{tpu_custom_call.1}
  #allocation0 [shape = 'u32[]', space=smem, size = 0x4, offset = 0x4, fixed_abs, tag = 'smem constant byte address 0x4 - core index']
  #allocation1 [shape = 'u32[144,128]{1,0:T(1,128)}', space=vmem, size = 0x12000, scoped, tag = 'internal scratch']
  %s0 = inlined_call_operand.hbm [shape: f32[2,4,4,4,16], index: 0, kind: input, shape index: {}]
  %s1 = inlined_call_operand.hbm [shape: f32[1,4,4,64], index: 1, kind: input, shape index: {}]
  %s2 = inlined_call_operand.hbm [shape: f32[2,4,4,64], index: 2, kind: output, shape index: {}]
  %s3 = sld [smem:[#allocation0]]
  $region49: #{tpu_custom_call.1} parent=0
    _
  %s5 = ssub.s32 1, %s3
  %s6 = scalar_select 0, %s5, %s3
  $region1: #{tpu_custom_call.1} parent=0
    #allocation2 [shape = 'u8[65536]{0}', space=vmem, size = 0x10000, scoped, tag = 'input window, operand 0']
    #allocation3 [shape = 's32[2]{0}', space=sflag, size = 0x8, scoped, tag = 'scoped memory for tpu_custom_call.1']
    #allocation4 [shape = 's32[2]{0}', space=sflag, size = 0x8, scoped, tag = 'scoped memory for tpu_custom_call.1']
    #allocation5 [shape = 'u8[8192]{0}', space=vmem, size = 0x2000, scoped, tag = 'input window, operand 1, single buffered']
    #allocation6 [shape = 's32[1]{0}', space=sflag, size = 0x4, scoped, tag = 'scoped memory for tpu_custom_call.1']
    #allocation7 [shape = 'u8[16384]{0}', space=vmem, size = 0x4000, scoped, tag = 'output window, operand 0']
    %7 = vsyncpa [#allocation3], 0
    %s8 = scalar_lea.sflag [#allocation3], 1
    %9 = vsyncpa %s8, 0
    %10 = vsyncpa [#allocation6], 0
    %11 = vsyncpa [#allocation4], 0
    %s12 = scalar_lea.sflag [#allocation4], 1
    %13 = vsyncpa %s12, 0
    loop: start=0, step=1, limit=4
    $region2: #{tpu_custom_call.1} parent=1 // loop_pre_header
      _
    $region3: #{tpu_custom_call.1} parent=1 // loop_header
      %s15 = sphi 0, %s19
      %p16 = scmp.ge.s32.totalorder %s15, 4
      %s22 = sphi 0, %s34
      %s23 = sphi 0, %s30
      %s24 = sphi 0, %s22
      %s25 = sphi 0, %s23
      %s26 = sphi 0, %s24
      %s27 = sphi 0, %s25
      %s39 = sphi 0, %s41
      %s42 = sphi 0, %s39
      %s43 = sphi 0, %s42
      %s59 = sphi 0, %s43
      %s65 = sphi 0, %s67
      %s68 = sphi 0, %s65
      %s69 = sphi 0, %s68
      %s85 = sphi 0, %s69
      %s93 = sphi 0, %s95
      %s96 = sphi 0, %s93
      %s97 = sphi 0, %s96
      %s113 = sphi 0, %s97
    $region4: #{tpu_custom_call.1} parent=1 // loop_header_branch
      %18 = sbr.rel (%p16) target = $region8
    $region5: #{tpu_custom_call.1} parent=1 // loop_body
      %s20 = ssub.s32 %s15, 1
      %s21 = ssub.s32 %s15, 2
      %s28 = sadd.s32 1, %s23
      %p29 = scmp.ge.s32.totalorder %s28, 2
      %s30 = scalar_select %p29, 0, %s28
      %s31 = sadd.s32 1, %s22
      %s32 = scalar_select %p29, %s31, %s22
      %p33 = scmp.ge.s32.totalorder %s32, 1
      %s34 = scalar_select %p33, 0, %s32
      %s35 = ssub.s32 %s23, %s30
      %s36 = ssub.s32 %s22, %s34
      %s37 = sor.u32 %s35, %s36
      %p38 = scmp.eq.s32.totalorder %s37, 0
      %s40 = sadd.s32 %s39, 1
      %s41 = scalar_select %p38, %s39, %s40
      %p44 = pneg %p38
      %p45 = scmp.eq.s32.totalorder %s15, 1
      %p46 = por %p44, %p45
      %p47 = scmp.ne.s32.totalorder %s39, %s42
      %p48 = scmp.eq.s32.totalorder %s15, 0
      %p49 = por %p47, %p48
      %p50 = scmp.ne.s32.totalorder %s39, %s42
      %p51 = scmp.eq.s32.totalorder %s20, 1
      %p52 = por %p50, %p51
      %p53 = scmp.ne.s32.totalorder %s42, %s43
      %p54 = scmp.eq.s32.totalorder %s20, 0
      %p55 = por %p53, %p54
      %p56 = scmp.ne.s32.totalorder %s42, %s43
      %p57 = scmp.eq.s32.totalorder %s21, 1
      %p58 = por %p56, %p57
      %p60 = scmp.ne.s32.totalorder %s43, %s59
      %p61 = scmp.eq.s32.totalorder %s21, 0
      %p62 = por %p60, %p61
      %s63 = ssub.s32 %s22, %s34
      %p64 = scmp.eq.s32.totalorder %s63, 0
      %s66 = sadd.s32 %s65, 1
      %s67 = scalar_select %p64, %s65, %s66
      %p70 = pneg %p64
      %p71 = scmp.eq.s32.totalorder %s15, 1
      %p72 = por %p70, %p71
      %p73 = scmp.ne.s32.totalorder %s65, %s68
      %p74 = scmp.eq.s32.totalorder %s15, 0
      %p75 = por %p73, %p74
      %p76 = scmp.ne.s32.totalorder %s65, %s68
      %p77 = scmp.eq.s32.totalorder %s20, 1
      %p78 = por %p76, %p77
      %p79 = scmp.ne.s32.totalorder %s68, %s69
      %p80 = scmp.eq.s32.totalorder %s20, 0
      %p81 = por %p79, %p80
      %p82 = scmp.ne.s32.totalorder %s68, %s69
      %p83 = scmp.eq.s32.totalorder %s21, 1
      %p84 = por %p82, %p83
      %p86 = scmp.ne.s32.totalorder %s69, %s85
      %p87 = scmp.eq.s32.totalorder %s21, 0
      %p88 = por %p86, %p87
      %s89 = ssub.s32 %s23, %s30
      %s90 = ssub.s32 %s22, %s34
      %s91 = sor.u32 %s89, %s90
      %p92 = scmp.eq.s32.totalorder %s91, 0
      %s94 = sadd.s32 %s93, 1
      %s95 = scalar_select %p92, %s93, %s94
      %p98 = pneg %p92
      %p99 = scmp.eq.s32.totalorder %s15, 1
      %p100 = por %p98, %p99
      %p101 = scmp.ne.s32.totalorder %s93, %s96
      %p102 = scmp.eq.s32.totalorder %s15, 0
      %p103 = por %p101, %p102
      %p104 = scmp.ne.s32.totalorder %s93, %s96
      %p105 = scmp.eq.s32.totalorder %s20, 1
      %p106 = por %p104, %p105
      %p107 = scmp.ne.s32.totalorder %s96, %s97
      %p108 = scmp.eq.s32.totalorder %s20, 0
      %p109 = por %p107, %p108
      %p110 = scmp.ne.s32.totalorder %s96, %s97
      %p111 = scmp.eq.s32.totalorder %s21, 1
      %p112 = por %p110, %p111
      %p114 = scmp.ne.s32.totalorder %s97, %s113
      %p115 = scmp.eq.s32.totalorder %s21, 0
      %p116 = por %p114, %p115
      %p117 = scmp.le.s32.totalorder 1, %s15
      %p118 = scmp.lt.s32.totalorder %s15, 3
      %p119 = pnand %p117, %p118
      %p120 = pneg %p119
      // Predicated region
      $region9: #{tpu_custom_call.1} parent=5 // pred_check
        _
      $region10: #{tpu_custom_call.1} parent=5 // pred_check_branch
        %122 = sbr.rel (%p119) target = $region12
      $region11: #{tpu_custom_call.1} parent=5 // pred_region
        %s123 = ssub.s32 %s15, 1
        // Predicated region
        $region13: #{tpu_custom_call.1} parent=11 // pred_check
          %p124 = pneg %p81
        $region14: #{tpu_custom_call.1} parent=11 // pred_check_branch
          %126 = sbr.rel (%p124) target = $region16
        $region15: #{tpu_custom_call.1} parent=11 // pred_region
          %s127 = smul.u32 4, %s24
          %s129 = ssub.s32 256, 256
          %130 = vsyncadd [#allocation6], %s129
          %s131 = smul.addr %s127, 64
          %s132 = scalar_lea.hbm %s1, %s131
          %s133 = sshll.u32 [#allocation5], 4
          %s134 = int_to_ptr.vmem [resolvable:$true] %s133
          %139 = dma.hbm_to_vmem [thread:$0]  %s132, 256, %s134, [#allocation6], 64, 64, 4
        $region16: #{tpu_custom_call.1} parent=11 // pred_fallthru
          _
      $region12: #{tpu_custom_call.1} parent=5 // pred_fallthru
        _
      %p140 = scmp.lt.s32.totalorder %s15, 2
      // Predicated region
      $region17: #{tpu_custom_call.1} parent=5 // pred_check
        %p141 = pneg %p140
      $region18: #{tpu_custom_call.1} parent=5 // pred_check_branch
        %143 = sbr.rel (%p141) target = $region20
      $region19: #{tpu_custom_call.1} parent=5 // pred_region
        // Predicated region
        $region21: #{tpu_custom_call.1} parent=19 // pred_check
          %p144 = pneg %p49
        $region22: #{tpu_custom_call.1} parent=19 // pred_check_branch
          %146 = sbr.rel (%p144) target = $region24
        $region23: #{tpu_custom_call.1} parent=19 // pred_region
          %s147 = sand.u32 %s39, 1
          %s148 = scalar_lea.sflag [#allocation3], %s147
          %s149 = sand.u32 %s39, 1
          %s150 = smul.addr %s149, 64
          %s151 = scalar_lea.vmem [#allocation2], %s150
          %s152 = smul.u32 4, %s22
          %s154 = ssub.s32 1024, 1024
          %155 = vsyncadd %s148, %s154
          %s156 = smul.addr %s23, 16
          %s157 = sadd.s32 %s152, %s156
          %s158 = smul.addr %s157, 64
          %s159 = scalar_lea.hbm %s0, %s158
          %s160 = sshll.u32 %s151, 4
          %s161 = int_to_ptr.vmem [resolvable:$true] %s160
          %166 = dma.hbm_to_vmem [thread:$0]  %s159, 1024, %s161, %s148, 64, 64, 4
        $region24: #{tpu_custom_call.1} parent=19 // pred_fallthru
          _
      $region20: #{tpu_custom_call.1} parent=5 // pred_fallthru
        _
      %p167 = scmp.le.s32.totalorder 1, %s15
      %p168 = scmp.lt.s32.totalorder %s15, 3
      %p169 = pnand %p167, %p168
      %p170 = pneg %p169
      // Predicated region
      $region25: #{tpu_custom_call.1} parent=5 // pred_check
        _
      $region26: #{tpu_custom_call.1} parent=5 // pred_check_branch
        %172 = sbr.rel (%p169) target = $region28
      $region27: #{tpu_custom_call.1} parent=5 // pred_region
        %s173 = ssub.s32 %s15, 1
        %s174 = sand.u32 %s42, 1
        %s175 = scalar_lea.sflag [#allocation3], %s174
        %s176 = sand.u32 %s42, 1
        %s177 = smul.addr %s176, 64
        %s178 = scalar_lea.vmem [#allocation2], %s177
        // Predicated region
        $region29: #{tpu_custom_call.1} parent=27 // pred_check
          %p179 = pneg %p55
        $region30: #{tpu_custom_call.1} parent=27 // pred_check_branch
          %181 = sbr.rel (%p179) target = $region32
        $region31: #{tpu_custom_call.1} parent=27 // pred_region
          %182 = dma.done %s175, 1024
        $region32: #{tpu_custom_call.1} parent=27 // pred_fallthru
          _
        // Predicated region
        $region33: #{tpu_custom_call.1} parent=27 // pred_check
          %p183 = pneg %p81
        $region34: #{tpu_custom_call.1} parent=27 // pred_check_branch
          %185 = sbr.rel (%p183) target = $region36
        $region35: #{tpu_custom_call.1} parent=27 // pred_region
          %186 = dma.done [#allocation6], 256
        $region36: #{tpu_custom_call.1} parent=27 // pred_fallthru
          _
        %s187 = sand.u32 %s42, 1
        %s188 = scalar_lea.sflag [#allocation3], %s187
        %s189 = sand.u32 %s42, 1
        %s190 = smul.addr %s189, 64
        %s191 = scalar_lea.vmem [#allocation2], %s190
        %p192 = pneg %p55
        %p193 = pneg %p52
        %p194 = pneg %p81
        %p195 = pneg %p78
        %p196 = pneg %p109
        %p197 = pneg %p106
        %s198 = sand.u32 %s96, 1
        %s199 = scalar_lea.sflag [#allocation4], %s198
        %s200 = sand.u32 %s96, 1
        %s201 = smul.addr %s200, 16
        %s202 = scalar_lea.vmem [#allocation7], %s201
        %s203 = smul.u32 4, %s24
        %s204 = smul.u32 4, %s24
        %s205 = smul.u32 4, %s24
        %v206 = vld [vmem:[%s178] sm:$0x1]
        %v207 = vld [vmem:[%s178 + $0x4] sm:$0x1]
        %v208 = vld [vmem:[%s178 + $0x8] sm:$0x1]
        %v209 = vld [vmem:[%s178 + $0xc] sm:$0x1]
        %214 = vrot.lane.b32.xlu0 %v206, 124
        %v215 = vpop.permute.xlu0 %214
        %216 = vrot.lane.b32.xlu0 %v207, 124
        %v217 = vpop.permute.xlu0 %216
        %218 = vrot.lane.b32.xlu0 %v208, 124
        %v219 = vpop.permute.xlu0 %218
        %220 = vrot.lane.b32.xlu0 %v209, 124
        %v221 = vpop.permute.xlu0 %220
        %226 = vrot.lane.b32.xlu0 %v206, 120
        %v227 = vpop.permute.xlu0 %226
        %228 = vrot.lane.b32.xlu0 %v207, 120
        %v229 = vpop.permute.xlu0 %228
        %230 = vrot.lane.b32.xlu0 %v208, 120
        %v231 = vpop.permute.xlu0 %230
        %232 = vrot.lane.b32.xlu0 %v209, 120
        %v233 = vpop.permute.xlu0 %232
        %238 = vrot.lane.b32.xlu0 %v206, 116
        %v239 = vpop.permute.xlu0 %238
        %240 = vrot.lane.b32.xlu0 %v207, 116
        %v241 = vpop.permute.xlu0 %240
        %242 = vrot.lane.b32.xlu0 %v208, 116
        %v243 = vpop.permute.xlu0 %242
        %244 = vrot.lane.b32.xlu0 %v209, 116
        %v245 = vpop.permute.xlu0 %244
        %v250 = vcombine.low %v206, %v227
        %v252 = vunpack.c.l.s4 1983009808
        %v253 = vunpack.c.0.s8 %v252
        %v254 = vlaneseq
        %v255 = vshrl.u32 %v254, 7
        %v256 = vsub.s32 %v253, %v255
        %v257 = vrot.slane %v250, %v256
        %v258 = vcombine.low %v215, %v239
        %v260 = vunpack.c.l.s4 1983009808
        %v261 = vunpack.c.0.s8 %v260
        %v262 = vlaneseq
        %v263 = vshrl.u32 %v262, 7
        %v264 = vsub.s32 %v261, %v263
        %v265 = vrot.slane %v258, %v264
        %v266 = vcombine.low %v257, %v265
        %v268 = vunpack.c.l.s4 1934713408
        %v269 = vunpack.c.0.s8 %v268
        %v270 = vlaneseq
        %v271 = vshrl.u32 %v270, 7
        %v272 = vsub.s32 %v269, %v271
        %v273 = vrot.slane %v266, %v272
        %v274 = vcombine.low %v207, %v229
        %v276 = vunpack.c.l.s4 1983009808
        %v277 = vunpack.c.0.s8 %v276
        %v278 = vlaneseq
        %v279 = vshrl.u32 %v278, 7
        %v280 = vsub.s32 %v277, %v279
        %v281 = vrot.slane %v274, %v280
        %v282 = vcombine.low %v217, %v241
        %v284 = vunpack.c.l.s4 1983009808
        %v285 = vunpack.c.0.s8 %v284
        %v286 = vlaneseq
        %v287 = vshrl.u32 %v286, 7
        %v288 = vsub.s32 %v285, %v287
        %v289 = vrot.slane %v282, %v288
        %v290 = vcombine.low %v281, %v289
        %v292 = vunpack.c.l.s4 1934713408
        %v293 = vunpack.c.0.s8 %v292
        %v294 = vlaneseq
        %v295 = vshrl.u32 %v294, 7
        %v296 = vsub.s32 %v293, %v295
        %v297 = vrot.slane %v290, %v296
        %v298 = vcombine.low %v208, %v231
        %v300 = vunpack.c.l.s4 1983009808
        %v301 = vunpack.c.0.s8 %v300
        %v302 = vlaneseq
        %v303 = vshrl.u32 %v302, 7
        %v304 = vsub.s32 %v301, %v303
        %v305 = vrot.slane %v298, %v304
        %v306 = vcombine.low %v219, %v243
        %v308 = vunpack.c.l.s4 1983009808
        %v309 = vunpack.c.0.s8 %v308
        %v310 = vlaneseq
        %v311 = vshrl.u32 %v310, 7
        %v312 = vsub.s32 %v309, %v311
        %v313 = vrot.slane %v306, %v312
        %v314 = vcombine.low %v305, %v313
        %v316 = vunpack.c.l.s4 1934713408
        %v317 = vunpack.c.0.s8 %v316
        %v318 = vlaneseq
        %v319 = vshrl.u32 %v318, 7
        %v320 = vsub.s32 %v317, %v319
        %v321 = vrot.slane %v314, %v320
        %v322 = vcombine.low %v209, %v233
        %v324 = vunpack.c.l.s4 1983009808
        %v325 = vunpack.c.0.s8 %v324
        %v326 = vlaneseq
        %v327 = vshrl.u32 %v326, 7
        %v328 = vsub.s32 %v325, %v327
        %v329 = vrot.slane %v322, %v328
        %v330 = vcombine.low %v221, %v245
        %v332 = vunpack.c.l.s4 1983009808
        %v333 = vunpack.c.0.s8 %v332
        %v334 = vlaneseq
        %v335 = vshrl.u32 %v334, 7
        %v336 = vsub.s32 %v333, %v335
        %v337 = vrot.slane %v330, %v336
        %v338 = vcombine.low %v329, %v337
        %v340 = vunpack.c.l.s4 1934713408
        %v341 = vunpack.c.0.s8 %v340
        %v342 = vlaneseq
        %v343 = vshrl.u32 %v342, 7
        %v344 = vsub.s32 %v341, %v343
        %v345 = vrot.slane %v338, %v344
        %v346 = vld [vmem:[%s178 + $0x1] sm:$0x1]
        %v347 = vld [vmem:[%s178 + $0x5] sm:$0x1]
        %v348 = vld [vmem:[%s178 + $0x9] sm:$0x1]
        %v349 = vld [vmem:[%s178 + $0xd] sm:$0x1]
        %354 = vrot.lane.b32.xlu0 %v346, 124
        %v355 = vpop.permute.xlu0 %354
        %356 = vrot.lane.b32.xlu0 %v347, 124
        %v357 = vpop.permute.xlu0 %356
        %358 = vrot.lane.b32.xlu0 %v348, 124
        %v359 = vpop.permute.xlu0 %358
        %360 = vrot.lane.b32.xlu0 %v349, 124
        %v361 = vpop.permute.xlu0 %360
        %366 = vrot.lane.b32.xlu0 %v346, 120
        %v367 = vpop.permute.xlu0 %366
        %368 = vrot.lane.b32.xlu0 %v347, 120
        %v369 = vpop.permute.xlu0 %368
        %370 = vrot.lane.b32.xlu0 %v348, 120
        %v371 = vpop.permute.xlu0 %370
        %372 = vrot.lane.b32.xlu0 %v349, 120
        %v373 = vpop.permute.xlu0 %372
        %378 = vrot.lane.b32.xlu0 %v346, 116
        %v379 = vpop.permute.xlu0 %378
        %380 = vrot.lane.b32.xlu0 %v347, 116
        %v381 = vpop.permute.xlu0 %380
        %382 = vrot.lane.b32.xlu0 %v348, 116
        %v383 = vpop.permute.xlu0 %382
        %384 = vrot.lane.b32.xlu0 %v349, 116
        %v385 = vpop.permute.xlu0 %384
        %v390 = vcombine.low %v346, %v367
        %v392 = vunpack.c.l.s4 1983009808
        %v393 = vunpack.c.0.s8 %v392
        %v394 = vlaneseq
        %v395 = vshrl.u32 %v394, 7
        %v396 = vsub.s32 %v393, %v395
        %v397 = vrot.slane %v390, %v396
        %v398 = vcombine.low %v355, %v379
        %v400 = vunpack.c.l.s4 1983009808
        %v401 = vunpack.c.0.s8 %v400
        %v402 = vlaneseq
        %v403 = vshrl.u32 %v402, 7
        %v404 = vsub.s32 %v401, %v403
        %v405 = vrot.slane %v398, %v404
        %v406 = vcombine.low %v397, %v405
        %v408 = vunpack.c.l.s4 1934713408
        %v409 = vunpack.c.0.s8 %v408
        %v410 = vlaneseq
        %v411 = vshrl.u32 %v410, 7
        %v412 = vsub.s32 %v409, %v411
        %v413 = vrot.slane %v406, %v412
        %v414 = vcombine.low %v347, %v369
        %v416 = vunpack.c.l.s4 1983009808
        %v417 = vunpack.c.0.s8 %v416
        %v418 = vlaneseq
        %v419 = vshrl.u32 %v418, 7
        %v420 = vsub.s32 %v417, %v419
        %v421 = vrot.slane %v414, %v420
        %v422 = vcombine.low %v357, %v381
        %v424 = vunpack.c.l.s4 1983009808
        %v425 = vunpack.c.0.s8 %v424
        %v426 = vlaneseq
        %v427 = vshrl.u32 %v426, 7
        %v428 = vsub.s32 %v425, %v427
        %v429 = vrot.slane %v422, %v428
        %v430 = vcombine.low %v421, %v429
        %v432 = vunpack.c.l.s4 1934713408
        %v433 = vunpack.c.0.s8 %v432
        %v434 = vlaneseq
        %v435 = vshrl.u32 %v434, 7
        %v436 = vsub.s32 %v433, %v435
        %v437 = vrot.slane %v430, %v436
        %v438 = vcombine.low %v348, %v371
        %v440 = vunpack.c.l.s4 1983009808
        %v441 = vunpack.c.0.s8 %v440
        %v442 = vlaneseq
        %v443 = vshrl.u32 %v442, 7
        %v444 = vsub.s32 %v441, %v443
        %v445 = vrot.slane %v438, %v444
        %v446 = vcombine.low %v359, %v383
        %v448 = vunpack.c.l.s4 1983009808
        %v449 = vunpack.c.0.s8 %v448
        %v450 = vlaneseq
        %v451 = vshrl.u32 %v450, 7
        %v452 = vsub.s32 %v449, %v451
        %v453 = vrot.slane %v446, %v452
        %v454 = vcombine.low %v445, %v453
        %v456 = vunpack.c.l.s4 1934713408
        %v457 = vunpack.c.0.s8 %v456
        %v458 = vlaneseq
        %v459 = vshrl.u32 %v458, 7
        %v460 = vsub.s32 %v457, %v459
        %v461 = vrot.slane %v454, %v460
        %v462 = vcombine.low %v349, %v373
        %v464 = vunpack.c.l.s4 1983009808
        %v465 = vunpack.c.0.s8 %v464
        %v466 = vlaneseq
        %v467 = vshrl.u32 %v466, 7
        %v468 = vsub.s32 %v465, %v467
        %v469 = vrot.slane %v462, %v468
        %v470 = vcombine.low %v361, %v385
        %v472 = vunpack.c.l.s4 1983009808
        %v473 = vunpack.c.0.s8 %v472
        %v474 = vlaneseq
        %v475 = vshrl.u32 %v474, 7
        %v476 = vsub.s32 %v473, %v475
        %v477 = vrot.slane %v470, %v476
        %v478 = vcombine.low %v469, %v477
        %v480 = vunpack.c.l.s4 1934713408
        %v481 = vunpack.c.0.s8 %v480
        %v482 = vlaneseq
        %v483 = vshrl.u32 %v482, 7
        %v484 = vsub.s32 %v481, %v483
        %v485 = vrot.slane %v478, %v484
        %v486 = vld [vmem:[%s178 + $0x2] sm:$0x1]
        %v487 = vld [vmem:[%s178 + $0x6] sm:$0x1]
        %v488 = vld [vmem:[%s178 + $0xa] sm:$0x1]
        %v489 = vld [vmem:[%s178 + $0xe] sm:$0x1]
        %494 = vrot.lane.b32.xlu0 %v486, 124
        %v495 = vpop.permute.xlu0 %494
        %496 = vrot.lane.b32.xlu0 %v487, 124
        %v497 = vpop.permute.xlu0 %496
        %498 = vrot.lane.b32.xlu0 %v488, 124
        %v499 = vpop.permute.xlu0 %498
        %500 = vrot.lane.b32.xlu0 %v489, 124
        %v501 = vpop.permute.xlu0 %500
        %506 = vrot.lane.b32.xlu0 %v486, 120
        %v507 = vpop.permute.xlu0 %506
        %508 = vrot.lane.b32.xlu0 %v487, 120
        %v509 = vpop.permute.xlu0 %508
        %510 = vrot.lane.b32.xlu0 %v488, 120
        %v511 = vpop.permute.xlu0 %510
        %512 = vrot.lane.b32.xlu0 %v489, 120
        %v513 = vpop.permute.xlu0 %512
        %518 = vrot.lane.b32.xlu0 %v486, 116
        %v519 = vpop.permute.xlu0 %518
        %520 = vrot.lane.b32.xlu0 %v487, 116
        %v521 = vpop.permute.xlu0 %520
        %522 = vrot.lane.b32.xlu0 %v488, 116
        %v523 = vpop.permute.xlu0 %522
        %524 = vrot.lane.b32.xlu0 %v489, 116
        %v525 = vpop.permute.xlu0 %524
        %v530 = vcombine.low %v486, %v507
        %v532 = vunpack.c.l.s4 1983009808
        %v533 = vunpack.c.0.s8 %v532
        %v534 = vlaneseq
        %v535 = vshrl.u32 %v534, 7
        %v536 = vsub.s32 %v533, %v535
        %v537 = vrot.slane %v530, %v536
        %v538 = vcombine.low %v495, %v519
        %v540 = vunpack.c.l.s4 1983009808
        %v541 = vunpack.c.0.s8 %v540
        %v542 = vlaneseq
        %v543 = vshrl.u32 %v542, 7
        %v544 = vsub.s32 %v541, %v543
        %v545 = vrot.slane %v538, %v544
        %v546 = vcombine.low %v537, %v545
        %v548 = vunpack.c.l.s4 1934713408
        %v549 = vunpack.c.0.s8 %v548
        %v550 = vlaneseq
        %v551 = vshrl.u32 %v550, 7
        %v552 = vsub.s32 %v549, %v551
        %v553 = vrot.slane %v546, %v552
        %v554 = vcombine.low %v487, %v509
        %v556 = vunpack.c.l.s4 1983009808
        %v557 = vunpack.c.0.s8 %v556
        %v558 = vlaneseq
        %v559 = vshrl.u32 %v558, 7
        %v560 = vsub.s32 %v557, %v559
        %v561 = vrot.slane %v554, %v560
        %v562 = vcombine.low %v497, %v521
        %v564 = vunpack.c.l.s4 1983009808
        %v565 = vunpack.c.0.s8 %v564
        %v566 = vlaneseq
        %v567 = vshrl.u32 %v566, 7
        %v568 = vsub.s32 %v565, %v567
        %v569 = vrot.slane %v562, %v568
        %v570 = vcombine.low %v561, %v569
        %v572 = vunpack.c.l.s4 1934713408
        %v573 = vunpack.c.0.s8 %v572
        %v574 = vlaneseq
        %v575 = vshrl.u32 %v574, 7
        %v576 = vsub.s32 %v573, %v575
        %v577 = vrot.slane %v570, %v576
        %v578 = vcombine.low %v488, %v511
        %v580 = vunpack.c.l.s4 1983009808
        %v581 = vunpack.c.0.s8 %v580
        %v582 = vlaneseq
        %v583 = vshrl.u32 %v582, 7
        %v584 = vsub.s32 %v581, %v583
        %v585 = vrot.slane %v578, %v584
        %v586 = vcombine.low %v499, %v523
        %v588 = vunpack.c.l.s4 1983009808
        %v589 = vunpack.c.0.s8 %v588
        %v590 = vlaneseq
        %v591 = vshrl.u32 %v590, 7
        %v592 = vsub.s32 %v589, %v591
        %v593 = vrot.slane %v586, %v592
        %v594 = vcombine.low %v585, %v593
        %v596 = vunpack.c.l.s4 1934713408
        %v597 = vunpack.c.0.s8 %v596
        %v598 = vlaneseq
        %v599 = vshrl.u32 %v598, 7
        %v600 = vsub.s32 %v597, %v599
        %v601 = vrot.slane %v594, %v600
        %v602 = vcombine.low %v489, %v513
        %v604 = vunpack.c.l.s4 1983009808
        %v605 = vunpack.c.0.s8 %v604
        %v606 = vlaneseq
        %v607 = vshrl.u32 %v606, 7
        %v608 = vsub.s32 %v605, %v607
        %v609 = vrot.slane %v602, %v608
        %v610 = vcombine.low %v501, %v525
        %v612 = vunpack.c.l.s4 1983009808
        %v613 = vunpack.c.0.s8 %v612
        %v614 = vlaneseq
        %v615 = vshrl.u32 %v614, 7
        %v616 = vsub.s32 %v613, %v615
        %v617 = vrot.slane %v610, %v616
        %v618 = vcombine.low %v609, %v617
        %v620 = vunpack.c.l.s4 1934713408
        %v621 = vunpack.c.0.s8 %v620
        %v622 = vlaneseq
        %v623 = vshrl.u32 %v622, 7
        %v624 = vsub.s32 %v621, %v623
        %v625 = vrot.slane %v618, %v624
        %v626 = vld [vmem:[%s178 + $0x3] sm:$0x1]
        %v627 = vld [vmem:[%s178 + $0x7] sm:$0x1]
        %v628 = vld [vmem:[%s178 + $0xb] sm:$0x1]
        %v629 = vld [vmem:[%s178 + $0xf] sm:$0x1]
        %634 = vrot.lane.b32.xlu0 %v626, 124
        %v635 = vpop.permute.xlu0 %634
        %636 = vrot.lane.b32.xlu0 %v627, 124
        %v637 = vpop.permute.xlu0 %636
        %638 = vrot.lane.b32.xlu0 %v628, 124
        %v639 = vpop.permute.xlu0 %638
        %640 = vrot.lane.b32.xlu0 %v629, 124
        %v641 = vpop.permute.xlu0 %640
        %646 = vrot.lane.b32.xlu0 %v626, 120
        %v647 = vpop.permute.xlu0 %646
        %648 = vrot.lane.b32.xlu0 %v627, 120
        %v649 = vpop.permute.xlu0 %648
        %650 = vrot.lane.b32.xlu0 %v628, 120
        %v651 = vpop.permute.xlu0 %650
        %652 = vrot.lane.b32.xlu0 %v629, 120
        %v653 = vpop.permute.xlu0 %652
        %658 = vrot.lane.b32.xlu0 %v626, 116
        %v659 = vpop.permute.xlu0 %658
        %660 = vrot.lane.b32.xlu0 %v627, 116
        %v661 = vpop.permute.xlu0 %660
        %662 = vrot.lane.b32.xlu0 %v628, 116
        %v663 = vpop.permute.xlu0 %662
        %664 = vrot.lane.b32.xlu0 %v629, 116
        %v665 = vpop.permute.xlu0 %664
        %v670 = vcombine.low %v626, %v647
        %v672 = vunpack.c.l.s4 1983009808
        %v673 = vunpack.c.0.s8 %v672
        %v674 = vlaneseq
        %v675 = vshrl.u32 %v674, 7
        %v676 = vsub.s32 %v673, %v675
        %v677 = vrot.slane %v670, %v676
        %v678 = vcombine.low %v635, %v659
        %v680 = vunpack.c.l.s4 1983009808
        %v681 = vunpack.c.0.s8 %v680
        %v682 = vlaneseq
        %v683 = vshrl.u32 %v682, 7
        %v684 = vsub.s32 %v681, %v683
        %v685 = vrot.slane %v678, %v684
        %v686 = vcombine.low %v677, %v685
        %v688 = vunpack.c.l.s4 1934713408
        %v689 = vunpack.c.0.s8 %v688
        %v690 = vlaneseq
        %v691 = vshrl.u32 %v690, 7
        %v692 = vsub.s32 %v689, %v691
        %v693 = vrot.slane %v686, %v692
        %v694 = vcombine.low %v627, %v649
        %v696 = vunpack.c.l.s4 1983009808
        %v697 = vunpack.c.0.s8 %v696
        %v698 = vlaneseq
        %v699 = vshrl.u32 %v698, 7
        %v700 = vsub.s32 %v697, %v699
        %v701 = vrot.slane %v694, %v700
        %v702 = vcombine.low %v637, %v661
        %v704 = vunpack.c.l.s4 1983009808
        %v705 = vunpack.c.0.s8 %v704
        %v706 = vlaneseq
        %v707 = vshrl.u32 %v706, 7
        %v708 = vsub.s32 %v705, %v707
        %v709 = vrot.slane %v702, %v708
        %v710 = vcombine.low %v701, %v709
        %v712 = vunpack.c.l.s4 1934713408
        %v713 = vunpack.c.0.s8 %v712
        %v714 = vlaneseq
        %v715 = vshrl.u32 %v714, 7
        %v716 = vsub.s32 %v713, %v715
        %v717 = vrot.slane %v710, %v716
        %v718 = vcombine.low %v628, %v651
        %v720 = vunpack.c.l.s4 1983009808
        %v721 = vunpack.c.0.s8 %v720
        %v722 = vlaneseq
        %v723 = vshrl.u32 %v722, 7
        %v724 = vsub.s32 %v721, %v723
        %v725 = vrot.slane %v718, %v724
        %v726 = vcombine.low %v639, %v663
        %v728 = vunpack.c.l.s4 1983009808
        %v729 = vunpack.c.0.s8 %v728
        %v730 = vlaneseq
        %v731 = vshrl.u32 %v730, 7
        %v732 = vsub.s32 %v729, %v731
        %v733 = vrot.slane %v726, %v732
        %v734 = vcombine.low %v725, %v733
        %v736 = vunpack.c.l.s4 1934713408
        %v737 = vunpack.c.0.s8 %v736
        %v738 = vlaneseq
        %v739 = vshrl.u32 %v738, 7
        %v740 = vsub.s32 %v737, %v739
        %v741 = vrot.slane %v734, %v740
        %v742 = vcombine.low %v629, %v653
        %v744 = vunpack.c.l.s4 1983009808
        %v745 = vunpack.c.0.s8 %v744
        %v746 = vlaneseq
        %v747 = vshrl.u32 %v746, 7
        %v748 = vsub.s32 %v745, %v747
        %v749 = vrot.slane %v742, %v748
        %v750 = vcombine.low %v641, %v665
        %v752 = vunpack.c.l.s4 1983009808
        %v753 = vunpack.c.0.s8 %v752
        %v754 = vlaneseq
        %v755 = vshrl.u32 %v754, 7
        %v756 = vsub.s32 %v753, %v755
        %v757 = vrot.slane %v750, %v756
        %v758 = vcombine.low %v749, %v757
        %v760 = vunpack.c.l.s4 1934713408
        %v761 = vunpack.c.0.s8 %v760
        %v762 = vlaneseq
        %v763 = vshrl.u32 %v762, 7
        %v764 = vsub.s32 %v761, %v763
        %v765 = vrot.slane %v758, %v764
        %s766 = scalar_lea.vmem %s178, 16 [#allocation2]
        %v767 = vld [vmem:[%s766] sm:$0x1]
        %v768 = vld [vmem:[%s766 + $0x4] sm:$0x1]
        %v769 = vld [vmem:[%s766 + $0x8] sm:$0x1]
        %v770 = vld [vmem:[%s766 + $0xc] sm:$0x1]
        %775 = vrot.lane.b32.xlu0 %v767, 124
        %v776 = vpop.permute.xlu0 %775
        %777 = vrot.lane.b32.xlu0 %v768, 124
        %v778 = vpop.permute.xlu0 %777
        %779 = vrot.lane.b32.xlu0 %v769, 124
        %v780 = vpop.permute.xlu0 %779
        %781 = vrot.lane.b32.xlu0 %v770, 124
        %v782 = vpop.permute.xlu0 %781
        %787 = vrot.lane.b32.xlu0 %v767, 120
        %v788 = vpop.permute.xlu0 %787
        %789 = vrot.lane.b32.xlu0 %v768, 120
        %v790 = vpop.permute.xlu0 %789
        %791 = vrot.lane.b32.xlu0 %v769, 120
        %v792 = vpop.permute.xlu0 %791
        %793 = vrot.lane.b32.xlu0 %v770, 120
        %v794 = vpop.permute.xlu0 %793
        %799 = vrot.lane.b32.xlu0 %v767, 116
        %v800 = vpop.permute.xlu0 %799
        %801 = vrot.lane.b32.xlu0 %v768, 116
        %v802 = vpop.permute.xlu0 %801
        %803 = vrot.lane.b32.xlu0 %v769, 116
        %v804 = vpop.permute.xlu0 %803
        %805 = vrot.lane.b32.xlu0 %v770, 116
        %v806 = vpop.permute.xlu0 %805
        %v811 = vcombine.low %v767, %v788
        %v813 = vunpack.c.l.s4 1983009808
        %v814 = vunpack.c.0.s8 %v813
        %v815 = vlaneseq
        %v816 = vshrl.u32 %v815, 7
        %v817 = vsub.s32 %v814, %v816
        %v818 = vrot.slane %v811, %v817
        %v819 = vcombine.low %v776, %v800
        %v821 = vunpack.c.l.s4 1983009808
        %v822 = vunpack.c.0.s8 %v821
        %v823 = vlaneseq
        %v824 = vshrl.u32 %v823, 7
        %v825 = vsub.s32 %v822, %v824
        %v826 = vrot.slane %v819, %v825
        %v827 = vcombine.low %v818, %v826
        %v829 = vunpack.c.l.s4 1934713408
        %v830 = vunpack.c.0.s8 %v829
        %v831 = vlaneseq
        %v832 = vshrl.u32 %v831, 7
        %v833 = vsub.s32 %v830, %v832
        %v834 = vrot.slane %v827, %v833
        %v835 = vcombine.low %v768, %v790
        %v837 = vunpack.c.l.s4 1983009808
        %v838 = vunpack.c.0.s8 %v837
        %v839 = vlaneseq
        %v840 = vshrl.u32 %v839, 7
        %v841 = vsub.s32 %v838, %v840
        %v842 = vrot.slane %v835, %v841
        %v843 = vcombine.low %v778, %v802
        %v845 = vunpack.c.l.s4 1983009808
        %v846 = vunpack.c.0.s8 %v845
        %v847 = vlaneseq
        %v848 = vshrl.u32 %v847, 7
        %v849 = vsub.s32 %v846, %v848
        %v850 = vrot.slane %v843, %v849
        %v851 = vcombine.low %v842, %v850
        %v853 = vunpack.c.l.s4 1934713408
        %v854 = vunpack.c.0.s8 %v853
        %v855 = vlaneseq
        %v856 = vshrl.u32 %v855, 7
        %v857 = vsub.s32 %v854, %v856
        %v858 = vrot.slane %v851, %v857
        %v859 = vcombine.low %v769, %v792
        %v861 = vunpack.c.l.s4 1983009808
        %v862 = vunpack.c.0.s8 %v861
        %v863 = vlaneseq
        %v864 = vshrl.u32 %v863, 7
        %v865 = vsub.s32 %v862, %v864
        %v866 = vrot.slane %v859, %v865
        %v867 = vcombine.low %v780, %v804
        %v869 = vunpack.c.l.s4 1983009808
        %v870 = vunpack.c.0.s8 %v869
        %v871 = vlaneseq
        %v872 = vshrl.u32 %v871, 7
        %v873 = vsub.s32 %v870, %v872
        %v874 = vrot.slane %v867, %v873
        %v875 = vcombine.low %v866, %v874
        %v877 = vunpack.c.l.s4 1934713408
        %v878 = vunpack.c.0.s8 %v877
        %v879 = vlaneseq
        %v880 = vshrl.u32 %v879, 7
        %v881 = vsub.s32 %v878, %v880
        %v882 = vrot.slane %v875, %v881
        %v883 = vcombine.low %v770, %v794
        %v885 = vunpack.c.l.s4 1983009808
        %v886 = vunpack.c.0.s8 %v885
        %v887 = vlaneseq
        %v888 = vshrl.u32 %v887, 7
        %v889 = vsub.s32 %v886, %v888
        %v890 = vrot.slane %v883, %v889
        %v891 = vcombine.low %v782, %v806
        %v893 = vunpack.c.l.s4 1983009808
        %v894 = vunpack.c.0.s8 %v893
        %v895 = vlaneseq
        %v896 = vshrl.u32 %v895, 7
        %v897 = vsub.s32 %v894, %v896
        %v898 = vrot.slane %v891, %v897
        %v899 = vcombine.low %v890, %v898
        %v901 = vunpack.c.l.s4 1934713408
        %v902 = vunpack.c.0.s8 %v901
        %v903 = vlaneseq
        %v904 = vshrl.u32 %v903, 7
        %v905 = vsub.s32 %v902, %v904
        %v906 = vrot.slane %v899, %v905
        %v907 = vld [vmem:[%s766 + $0x1] sm:$0x1]
        %v908 = vld [vmem:[%s766 + $0x5] sm:$0x1]
        %v909 = vld [vmem:[%s766 + $0x9] sm:$0x1]
        %v910 = vld [vmem:[%s766 + $0xd] sm:$0x1]
        %915 = vrot.lane.b32.xlu0 %v907, 124
        %v916 = vpop.permute.xlu0 %915
        %917 = vrot.lane.b32.xlu0 %v908, 124
        %v918 = vpop.permute.xlu0 %917
        %919 = vrot.lane.b32.xlu0 %v909, 124
        %v920 = vpop.permute.xlu0 %919
        %921 = vrot.lane.b32.xlu0 %v910, 124
        %v922 = vpop.permute.xlu0 %921
        %927 = vrot.lane.b32.xlu0 %v907, 120
        %v928 = vpop.permute.xlu0 %927
        %929 = vrot.lane.b32.xlu0 %v908, 120
        %v930 = vpop.permute.xlu0 %929
        %931 = vrot.lane.b32.xlu0 %v909, 120
        %v932 = vpop.permute.xlu0 %931
        %933 = vrot.lane.b32.xlu0 %v910, 120
        %v934 = vpop.permute.xlu0 %933
        %939 = vrot.lane.b32.xlu0 %v907, 116
        %v940 = vpop.permute.xlu0 %939
        %941 = vrot.lane.b32.xlu0 %v908, 116
        %v942 = vpop.permute.xlu0 %941
        %943 = vrot.lane.b32.xlu0 %v909, 116
        %v944 = vpop.permute.xlu0 %943
        %945 = vrot.lane.b32.xlu0 %v910, 116
        %v946 = vpop.permute.xlu0 %945
        %v951 = vcombine.low %v907, %v928
        %v953 = vunpack.c.l.s4 1983009808
        %v954 = vunpack.c.0.s8 %v953
        %v955 = vlaneseq
        %v956 = vshrl.u32 %v955, 7
        %v957 = vsub.s32 %v954, %v956
        %v958 = vrot.slane %v951, %v957
        %v959 = vcombine.low %v916, %v940
        %v961 = vunpack.c.l.s4 1983009808
        %v962 = vunpack.c.0.s8 %v961
        %v963 = vlaneseq
        %v964 = vshrl.u32 %v963, 7
        %v965 = vsub.s32 %v962, %v964
        %v966 = vrot.slane %v959, %v965
        %v967 = vcombine.low %v958, %v966
        %v969 = vunpack.c.l.s4 1934713408
        %v970 = vunpack.c.0.s8 %v969
        %v971 = vlaneseq
        %v972 = vshrl.u32 %v971, 7
        %v973 = vsub.s32 %v970, %v972
        %v974 = vrot.slane %v967, %v973
        %v975 = vcombine.low %v908, %v930
        %v977 = vunpack.c.l.s4 1983009808
        %v978 = vunpack.c.0.s8 %v977
        %v979 = vlaneseq
        %v980 = vshrl.u32 %v979, 7
        %v981 = vsub.s32 %v978, %v980
        %v982 = vrot.slane %v975, %v981
        %v983 = vcombine.low %v918, %v942
        %v985 = vunpack.c.l.s4 1983009808
        %v986 = vunpack.c.0.s8 %v985
        %v987 = vlaneseq
        %v988 = vshrl.u32 %v987, 7
        %v989 = vsub.s32 %v986, %v988
        %v990 = vrot.slane %v983, %v989
        %v991 = vcombine.low %v982, %v990
        %v993 = vunpack.c.l.s4 1934713408
        %v994 = vunpack.c.0.s8 %v993
        %v995 = vlaneseq
        %v996 = vshrl.u32 %v995, 7
        %v997 = vsub.s32 %v994, %v996
        %v998 = vrot.slane %v991, %v997
        %v999 = vcombine.low %v909, %v932
        %v1001 = vunpack.c.l.s4 1983009808
        %v1002 = vunpack.c.0.s8 %v1001
        %v1003 = vlaneseq
        %v1004 = vshrl.u32 %v1003, 7
        %v1005 = vsub.s32 %v1002, %v1004
        %v1006 = vrot.slane %v999, %v1005
        %v1007 = vcombine.low %v920, %v944
        %v1009 = vunpack.c.l.s4 1983009808
        %v1010 = vunpack.c.0.s8 %v1009
        %v1011 = vlaneseq
        %v1012 = vshrl.u32 %v1011, 7
        %v1013 = vsub.s32 %v1010, %v1012
        %v1014 = vrot.slane %v1007, %v1013
        %v1015 = vcombine.low %v1006, %v1014
        %v1017 = vunpack.c.l.s4 1934713408
        %v1018 = vunpack.c.0.s8 %v1017
        %v1019 = vlaneseq
        %v1020 = vshrl.u32 %v1019, 7
        %v1021 = vsub.s32 %v1018, %v1020
        %v1022 = vrot.slane %v1015, %v1021
        %v1023 = vcombine.low %v910, %v934
        %v1025 = vunpack.c.l.s4 1983009808
        %v1026 = vunpack.c.0.s8 %v1025
        %v1027 = vlaneseq
        %v1028 = vshrl.u32 %v1027, 7
        %v1029 = vsub.s32 %v1026, %v1028
        %v1030 = vrot.slane %v1023, %v1029
        %v1031 = vcombine.low %v922, %v946
        %v1033 = vunpack.c.l.s4 1983009808
        %v1034 = vunpack.c.0.s8 %v1033
        %v1035 = vlaneseq
        %v1036 = vshrl.u32 %v1035, 7
        %v1037 = vsub.s32 %v1034, %v1036
        %v1038 = vrot.slane %v1031, %v1037
        %v1039 = vcombine.low %v1030, %v1038
        %v1041 = vunpack.c.l.s4 1934713408
        %v1042 = vunpack.c.0.s8 %v1041
        %v1043 = vlaneseq
        %v1044 = vshrl.u32 %v1043, 7
        %v1045 = vsub.s32 %v1042, %v1044
        %v1046 = vrot.slane %v1039, %v1045
        %v1047 = vld [vmem:[%s766 + $0x2] sm:$0x1]
        %v1048 = vld [vmem:[%s766 + $0x6] sm:$0x1]
        %v1049 = vld [vmem:[%s766 + $0xa] sm:$0x1]
        %v1050 = vld [vmem:[%s766 + $0xe] sm:$0x1]
        %1055 = vrot.lane.b32.xlu0 %v1047, 124
        %v1056 = vpop.permute.xlu0 %1055
        %1057 = vrot.lane.b32.xlu0 %v1048, 124
        %v1058 = vpop.permute.xlu0 %1057
        %1059 = vrot.lane.b32.xlu0 %v1049, 124
        %v1060 = vpop.permute.xlu0 %1059
        %1061 = vrot.lane.b32.xlu0 %v1050, 124
        %v1062 = vpop.permute.xlu0 %1061
        %1067 = vrot.lane.b32.xlu0 %v1047, 120
        %v1068 = vpop.permute.xlu0 %1067
        %1069 = vrot.lane.b32.xlu0 %v1048, 120
        %v1070 = vpop.permute.xlu0 %1069
        %1071 = vrot.lane.b32.xlu0 %v1049, 120
        %v1072 = vpop.permute.xlu0 %1071
        %1073 = vrot.lane.b32.xlu0 %v1050, 120
        %v1074 = vpop.permute.xlu0 %1073
        %1079 = vrot.lane.b32.xlu0 %v1047, 116
        %v1080 = vpop.permute.xlu0 %1079
        %1081 = vrot.lane.b32.xlu0 %v1048, 116
        %v1082 = vpop.permute.xlu0 %1081
        %1083 = vrot.lane.b32.xlu0 %v1049, 116
        %v1084 = vpop.permute.xlu0 %1083
        %1085 = vrot.lane.b32.xlu0 %v1050, 116
        %v1086 = vpop.permute.xlu0 %1085
        %v1091 = vcombine.low %v1047, %v1068
        %v1093 = vunpack.c.l.s4 1983009808
        %v1094 = vunpack.c.0.s8 %v1093
        %v1095 = vlaneseq
        %v1096 = vshrl.u32 %v1095, 7
        %v1097 = vsub.s32 %v1094, %v1096
        %v1098 = vrot.slane %v1091, %v1097
        %v1099 = vcombine.low %v1056, %v1080
        %v1101 = vunpack.c.l.s4 1983009808
        %v1102 = vunpack.c.0.s8 %v1101
        %v1103 = vlaneseq
        %v1104 = vshrl.u32 %v1103, 7
        %v1105 = vsub.s32 %v1102, %v1104
        %v1106 = vrot.slane %v1099, %v1105
        %v1107 = vcombine.low %v1098, %v1106
        %v1109 = vunpack.c.l.s4 1934713408
        %v1110 = vunpack.c.0.s8 %v1109
        %v1111 = vlaneseq
        %v1112 = vshrl.u32 %v1111, 7
        %v1113 = vsub.s32 %v1110, %v1112
        %v1114 = vrot.slane %v1107, %v1113
        %v1115 = vcombine.low %v1048, %v1070
        %v1117 = vunpack.c.l.s4 1983009808
        %v1118 = vunpack.c.0.s8 %v1117
        %v1119 = vlaneseq
        %v1120 = vshrl.u32 %v1119, 7
        %v1121 = vsub.s32 %v1118, %v1120
        %v1122 = vrot.slane %v1115, %v1121
        %v1123 = vcombine.low %v1058, %v1082
        %v1125 = vunpack.c.l.s4 1983009808
        %v1126 = vunpack.c.0.s8 %v1125
        %v1127 = vlaneseq
        %v1128 = vshrl.u32 %v1127, 7
        %v1129 = vsub.s32 %v1126, %v1128
        %v1130 = vrot.slane %v1123, %v1129
        %v1131 = vcombine.low %v1122, %v1130
        %v1133 = vunpack.c.l.s4 1934713408
        %v1134 = vunpack.c.0.s8 %v1133
        %v1135 = vlaneseq
        %v1136 = vshrl.u32 %v1135, 7
        %v1137 = vsub.s32 %v1134, %v1136
        %v1138 = vrot.slane %v1131, %v1137
        %v1139 = vcombine.low %v1049, %v1072
        %v1141 = vunpack.c.l.s4 1983009808
        %v1142 = vunpack.c.0.s8 %v1141
        %v1143 = vlaneseq
        %v1144 = vshrl.u32 %v1143, 7
        %v1145 = vsub.s32 %v1142, %v1144
        %v1146 = vrot.slane %v1139, %v1145
        %v1147 = vcombine.low %v1060, %v1084
        %v1149 = vunpack.c.l.s4 1983009808
        %v1150 = vunpack.c.0.s8 %v1149
        %v1151 = vlaneseq
        %v1152 = vshrl.u32 %v1151, 7
        %v1153 = vsub.s32 %v1150, %v1152
        %v1154 = vrot.slane %v1147, %v1153
        %v1155 = vcombine.low %v1146, %v1154
        %v1157 = vunpack.c.l.s4 1934713408
        %v1158 = vunpack.c.0.s8 %v1157
        %v1159 = vlaneseq
        %v1160 = vshrl.u32 %v1159, 7
        %v1161 = vsub.s32 %v1158, %v1160
        %v1162 = vrot.slane %v1155, %v1161
        %v1163 = vcombine.low %v1050, %v1074
        %v1165 = vunpack.c.l.s4 1983009808
        %v1166 = vunpack.c.0.s8 %v1165
        %v1167 = vlaneseq
        %v1168 = vshrl.u32 %v1167, 7
        %v1169 = vsub.s32 %v1166, %v1168
        %v1170 = vrot.slane %v1163, %v1169
        %v1171 = vcombine.low %v1062, %v1086
        %v1173 = vunpack.c.l.s4 1983009808
        %v1174 = vunpack.c.0.s8 %v1173
        %v1175 = vlaneseq
        %v1176 = vshrl.u32 %v1175, 7
        %v1177 = vsub.s32 %v1174, %v1176
        %v1178 = vrot.slane %v1171, %v1177
        %v1179 = vcombine.low %v1170, %v1178
        %v1181 = vunpack.c.l.s4 1934713408
        %v1182 = vunpack.c.0.s8 %v1181
        %v1183 = vlaneseq
        %v1184 = vshrl.u32 %v1183, 7
        %v1185 = vsub.s32 %v1182, %v1184
        %v1186 = vrot.slane %v1179, %v1185
        %v1187 = vld [vmem:[%s766 + $0x3] sm:$0x1]
        %v1188 = vld [vmem:[%s766 + $0x7] sm:$0x1]
        %v1189 = vld [vmem:[%s766 + $0xb] sm:$0x1]
        %v1190 = vld [vmem:[%s766 + $0xf] sm:$0x1]
        %1195 = vrot.lane.b32.xlu0 %v1187, 124
        %v1196 = vpop.permute.xlu0 %1195
        %1197 = vrot.lane.b32.xlu0 %v1188, 124
        %v1198 = vpop.permute.xlu0 %1197
        %1199 = vrot.lane.b32.xlu0 %v1189, 124
        %v1200 = vpop.permute.xlu0 %1199
        %1201 = vrot.lane.b32.xlu0 %v1190, 124
        %v1202 = vpop.permute.xlu0 %1201
        %1207 = vrot.lane.b32.xlu0 %v1187, 120
        %v1208 = vpop.permute.xlu0 %1207
        %1209 = vrot.lane.b32.xlu0 %v1188, 120
        %v1210 = vpop.permute.xlu0 %1209
        %1211 = vrot.lane.b32.xlu0 %v1189, 120
        %v1212 = vpop.permute.xlu0 %1211
        %1213 = vrot.lane.b32.xlu0 %v1190, 120
        %v1214 = vpop.permute.xlu0 %1213
        %1219 = vrot.lane.b32.xlu0 %v1187, 116
        %v1220 = vpop.permute.xlu0 %1219
        %1221 = vrot.lane.b32.xlu0 %v1188, 116
        %v1222 = vpop.permute.xlu0 %1221
        %1223 = vrot.lane.b32.xlu0 %v1189, 116
        %v1224 = vpop.permute.xlu0 %1223
        %1225 = vrot.lane.b32.xlu0 %v1190, 116
        %v1226 = vpop.permute.xlu0 %1225
        %v1231 = vcombine.low %v1187, %v1208
        %v1233 = vunpack.c.l.s4 1983009808
        %v1234 = vunpack.c.0.s8 %v1233
        %v1235 = vlaneseq
        %v1236 = vshrl.u32 %v1235, 7
        %v1237 = vsub.s32 %v1234, %v1236
        %v1238 = vrot.slane %v1231, %v1237
        %v1239 = vcombine.low %v1196, %v1220
        %v1241 = vunpack.c.l.s4 1983009808
        %v1242 = vunpack.c.0.s8 %v1241
        %v1243 = vlaneseq
        %v1244 = vshrl.u32 %v1243, 7
        %v1245 = vsub.s32 %v1242, %v1244
        %v1246 = vrot.slane %v1239, %v1245
        %v1247 = vcombine.low %v1238, %v1246
        %v1249 = vunpack.c.l.s4 1934713408
        %v1250 = vunpack.c.0.s8 %v1249
        %v1251 = vlaneseq
        %v1252 = vshrl.u32 %v1251, 7
        %v1253 = vsub.s32 %v1250, %v1252
        %v1254 = vrot.slane %v1247, %v1253
        %v1255 = vcombine.low %v1188, %v1210
        %v1257 = vunpack.c.l.s4 1983009808
        %v1258 = vunpack.c.0.s8 %v1257
        %v1259 = vlaneseq
        %v1260 = vshrl.u32 %v1259, 7
        %v1261 = vsub.s32 %v1258, %v1260
        %v1262 = vrot.slane %v1255, %v1261
        %v1263 = vcombine.low %v1198, %v1222
        %v1265 = vunpack.c.l.s4 1983009808
        %v1266 = vunpack.c.0.s8 %v1265
        %v1267 = vlaneseq
        %v1268 = vshrl.u32 %v1267, 7
        %v1269 = vsub.s32 %v1266, %v1268
        %v1270 = vrot.slane %v1263, %v1269
        %v1271 = vcombine.low %v1262, %v1270
        %v1273 = vunpack.c.l.s4 1934713408
        %v1274 = vunpack.c.0.s8 %v1273
        %v1275 = vlaneseq
        %v1276 = vshrl.u32 %v1275, 7
        %v1277 = vsub.s32 %v1274, %v1276
        %v1278 = vrot.slane %v1271, %v1277
        %v1279 = vcombine.low %v1189, %v1212
        %v1281 = vunpack.c.l.s4 1983009808
        %v1282 = vunpack.c.0.s8 %v1281
        %v1283 = vlaneseq
        %v1284 = vshrl.u32 %v1283, 7
        %v1285 = vsub.s32 %v1282, %v1284
        %v1286 = vrot.slane %v1279, %v1285
        %v1287 = vcombine.low %v1200, %v1224
        %v1289 = vunpack.c.l.s4 1983009808
        %v1290 = vunpack.c.0.s8 %v1289
        %v1291 = vlaneseq
        %v1292 = vshrl.u32 %v1291, 7
        %v1293 = vsub.s32 %v1290, %v1292
        %v1294 = vrot.slane %v1287, %v1293
        %v1295 = vcombine.low %v1286, %v1294
        %v1297 = vunpack.c.l.s4 1934713408
        %v1298 = vunpack.c.0.s8 %v1297
        %v1299 = vlaneseq
        %v1300 = vshrl.u32 %v1299, 7
        %v1301 = vsub.s32 %v1298, %v1300
        %v1302 = vrot.slane %v1295, %v1301
        %v1303 = vcombine.low %v1190, %v1214
        %v1305 = vunpack.c.l.s4 1983009808
        %v1306 = vunpack.c.0.s8 %v1305
        %v1307 = vlaneseq
        %v1308 = vshrl.u32 %v1307, 7
        %v1309 = vsub.s32 %v1306, %v1308
        %v1310 = vrot.slane %v1303, %v1309
        %v1311 = vcombine.low %v1202, %v1226
        %v1313 = vunpack.c.l.s4 1983009808
        %v1314 = vunpack.c.0.s8 %v1313
        %v1315 = vlaneseq
        %v1316 = vshrl.u32 %v1315, 7
        %v1317 = vsub.s32 %v1314, %v1316
        %v1318 = vrot.slane %v1311, %v1317
        %v1319 = vcombine.low %v1310, %v1318
        %v1321 = vunpack.c.l.s4 1934713408
        %v1322 = vunpack.c.0.s8 %v1321
        %v1323 = vlaneseq
        %v1324 = vshrl.u32 %v1323, 7
        %v1325 = vsub.s32 %v1322, %v1324
        %v1326 = vrot.slane %v1319, %v1325
        %s1327 = scalar_lea.vmem %s178, 32 [#allocation2]
        %v1328 = vld [vmem:[%s1327] sm:$0x1]
        %v1329 = vld [vmem:[%s1327 + $0x4] sm:$0x1]
        %v1330 = vld [vmem:[%s1327 + $0x8] sm:$0x1]
        %v1331 = vld [vmem:[%s1327 + $0xc] sm:$0x1]
        %1336 = vrot.lane.b32.xlu0 %v1328, 124
        %v1337 = vpop.permute.xlu0 %1336
        %1338 = vrot.lane.b32.xlu0 %v1329, 124
        %v1339 = vpop.permute.xlu0 %1338
        %1340 = vrot.lane.b32.xlu0 %v1330, 124
        %v1341 = vpop.permute.xlu0 %1340
        %1342 = vrot.lane.b32.xlu0 %v1331, 124
        %v1343 = vpop.permute.xlu0 %1342
        %1348 = vrot.lane.b32.xlu0 %v1328, 120
        %v1349 = vpop.permute.xlu0 %1348
        %1350 = vrot.lane.b32.xlu0 %v1329, 120
        %v1351 = vpop.permute.xlu0 %1350
        %1352 = vrot.lane.b32.xlu0 %v1330, 120
        %v1353 = vpop.permute.xlu0 %1352
        %1354 = vrot.lane.b32.xlu0 %v1331, 120
        %v1355 = vpop.permute.xlu0 %1354
        %1360 = vrot.lane.b32.xlu0 %v1328, 116
        %v1361 = vpop.permute.xlu0 %1360
        %1362 = vrot.lane.b32.xlu0 %v1329, 116
        %v1363 = vpop.permute.xlu0 %1362
        %1364 = vrot.lane.b32.xlu0 %v1330, 116
        %v1365 = vpop.permute.xlu0 %1364
        %1366 = vrot.lane.b32.xlu0 %v1331, 116
        %v1367 = vpop.permute.xlu0 %1366
        %v1372 = vcombine.low %v1328, %v1349
        %v1374 = vunpack.c.l.s4 1983009808
        %v1375 = vunpack.c.0.s8 %v1374
        %v1376 = vlaneseq
        %v1377 = vshrl.u32 %v1376, 7
        %v1378 = vsub.s32 %v1375, %v1377
        %v1379 = vrot.slane %v1372, %v1378
        %v1380 = vcombine.low %v1337, %v1361
        %v1382 = vunpack.c.l.s4 1983009808
        %v1383 = vunpack.c.0.s8 %v1382
        %v1384 = vlaneseq
        %v1385 = vshrl.u32 %v1384, 7
        %v1386 = vsub.s32 %v1383, %v1385
        %v1387 = vrot.slane %v1380, %v1386
        %v1388 = vcombine.low %v1379, %v1387
        %v1390 = vunpack.c.l.s4 1934713408
        %v1391 = vunpack.c.0.s8 %v1390
        %v1392 = vlaneseq
        %v1393 = vshrl.u32 %v1392, 7
        %v1394 = vsub.s32 %v1391, %v1393
        %v1395 = vrot.slane %v1388, %v1394
        %v1396 = vcombine.low %v1329, %v1351
        %v1398 = vunpack.c.l.s4 1983009808
        %v1399 = vunpack.c.0.s8 %v1398
        %v1400 = vlaneseq
        %v1401 = vshrl.u32 %v1400, 7
        %v1402 = vsub.s32 %v1399, %v1401
        %v1403 = vrot.slane %v1396, %v1402
        %v1404 = vcombine.low %v1339, %v1363
        %v1406 = vunpack.c.l.s4 1983009808
        %v1407 = vunpack.c.0.s8 %v1406
        %v1408 = vlaneseq
        %v1409 = vshrl.u32 %v1408, 7
        %v1410 = vsub.s32 %v1407, %v1409
        %v1411 = vrot.slane %v1404, %v1410
        %v1412 = vcombine.low %v1403, %v1411
        %v1414 = vunpack.c.l.s4 1934713408
        %v1415 = vunpack.c.0.s8 %v1414
        %v1416 = vlaneseq
        %v1417 = vshrl.u32 %v1416, 7
        %v1418 = vsub.s32 %v1415, %v1417
        %v1419 = vrot.slane %v1412, %v1418
        %v1420 = vcombine.low %v1330, %v1353
        %v1422 = vunpack.c.l.s4 1983009808
        %v1423 = vunpack.c.0.s8 %v1422
        %v1424 = vlaneseq
        %v1425 = vshrl.u32 %v1424, 7
        %v1426 = vsub.s32 %v1423, %v1425
        %v1427 = vrot.slane %v1420, %v1426
        %v1428 = vcombine.low %v1341, %v1365
        %v1430 = vunpack.c.l.s4 1983009808
        %v1431 = vunpack.c.0.s8 %v1430
        %v1432 = vlaneseq
        %v1433 = vshrl.u32 %v1432, 7
        %v1434 = vsub.s32 %v1431, %v1433
        %v1435 = vrot.slane %v1428, %v1434
        %v1436 = vcombine.low %v1427, %v1435
        %v1438 = vunpack.c.l.s4 1934713408
        %v1439 = vunpack.c.0.s8 %v1438
        %v1440 = vlaneseq
        %v1441 = vshrl.u32 %v1440, 7
        %v1442 = vsub.s32 %v1439, %v1441
        %v1443 = vrot.slane %v1436, %v1442
        %v1444 = vcombine.low %v1331, %v1355
        %v1446 = vunpack.c.l.s4 1983009808
        %v1447 = vunpack.c.0.s8 %v1446
        %v1448 = vlaneseq
        %v1449 = vshrl.u32 %v1448, 7
        %v1450 = vsub.s32 %v1447, %v1449
        %v1451 = vrot.slane %v1444, %v1450
        %v1452 = vcombine.low %v1343, %v1367
        %v1454 = vunpack.c.l.s4 1983009808
        %v1455 = vunpack.c.0.s8 %v1454
        %v1456 = vlaneseq
        %v1457 = vshrl.u32 %v1456, 7
        %v1458 = vsub.s32 %v1455, %v1457
        %v1459 = vrot.slane %v1452, %v1458
        %v1460 = vcombine.low %v1451, %v1459
        %v1462 = vunpack.c.l.s4 1934713408
        %v1463 = vunpack.c.0.s8 %v1462
        %v1464 = vlaneseq
        %v1465 = vshrl.u32 %v1464, 7
        %v1466 = vsub.s32 %v1463, %v1465
        %v1467 = vrot.slane %v1460, %v1466
        %v1468 = vld [vmem:[%s1327 + $0x1] sm:$0x1]
        %v1469 = vld [vmem:[%s1327 + $0x5] sm:$0x1]
        %v1470 = vld [vmem:[%s1327 + $0x9] sm:$0x1]
        %v1471 = vld [vmem:[%s1327 + $0xd] sm:$0x1]
        %1476 = vrot.lane.b32.xlu0 %v1468, 124
        %v1477 = vpop.permute.xlu0 %1476
        %1478 = vrot.lane.b32.xlu0 %v1469, 124
        %v1479 = vpop.permute.xlu0 %1478
        %1480 = vrot.lane.b32.xlu0 %v1470, 124
        %v1481 = vpop.permute.xlu0 %1480
        %1482 = vrot.lane.b32.xlu0 %v1471, 124
        %v1483 = vpop.permute.xlu0 %1482
        %1488 = vrot.lane.b32.xlu0 %v1468, 120
        %v1489 = vpop.permute.xlu0 %1488
        %1490 = vrot.lane.b32.xlu0 %v1469, 120
        %v1491 = vpop.permute.xlu0 %1490
        %1492 = vrot.lane.b32.xlu0 %v1470, 120
        %v1493 = vpop.permute.xlu0 %1492
        %1494 = vrot.lane.b32.xlu0 %v1471, 120
        %v1495 = vpop.permute.xlu0 %1494
        %1500 = vrot.lane.b32.xlu0 %v1468, 116
        %v1501 = vpop.permute.xlu0 %1500
        %1502 = vrot.lane.b32.xlu0 %v1469, 116
        %v1503 = vpop.permute.xlu0 %1502
        %1504 = vrot.lane.b32.xlu0 %v1470, 116
        %v1505 = vpop.permute.xlu0 %1504
        %1506 = vrot.lane.b32.xlu0 %v1471, 116
        %v1507 = vpop.permute.xlu0 %1506
        %v1512 = vcombine.low %v1468, %v1489
        %v1514 = vunpack.c.l.s4 1983009808
        %v1515 = vunpack.c.0.s8 %v1514
        %v1516 = vlaneseq
        %v1517 = vshrl.u32 %v1516, 7
        %v1518 = vsub.s32 %v1515, %v1517
        %v1519 = vrot.slane %v1512, %v1518
        %v1520 = vcombine.low %v1477, %v1501
        %v1522 = vunpack.c.l.s4 1983009808
        %v1523 = vunpack.c.0.s8 %v1522
        %v1524 = vlaneseq
        %v1525 = vshrl.u32 %v1524, 7
        %v1526 = vsub.s32 %v1523, %v1525
        %v1527 = vrot.slane %v1520, %v1526
        %v1528 = vcombine.low %v1519, %v1527
        %v1530 = vunpack.c.l.s4 1934713408
        %v1531 = vunpack.c.0.s8 %v1530
        %v1532 = vlaneseq
        %v1533 = vshrl.u32 %v1532, 7
        %v1534 = vsub.s32 %v1531, %v1533
        %v1535 = vrot.slane %v1528, %v1534
        %v1536 = vcombine.low %v1469, %v1491
        %v1538 = vunpack.c.l.s4 1983009808
        %v1539 = vunpack.c.0.s8 %v1538
        %v1540 = vlaneseq
        %v1541 = vshrl.u32 %v1540, 7
        %v1542 = vsub.s32 %v1539, %v1541
        %v1543 = vrot.slane %v1536, %v1542
        %v1544 = vcombine.low %v1479, %v1503
        %v1546 = vunpack.c.l.s4 1983009808
        %v1547 = vunpack.c.0.s8 %v1546
        %v1548 = vlaneseq
        %v1549 = vshrl.u32 %v1548, 7
        %v1550 = vsub.s32 %v1547, %v1549
        %v1551 = vrot.slane %v1544, %v1550
        %v1552 = vcombine.low %v1543, %v1551
        %v1554 = vunpack.c.l.s4 1934713408
        %v1555 = vunpack.c.0.s8 %v1554
        %v1556 = vlaneseq
        %v1557 = vshrl.u32 %v1556, 7
        %v1558 = vsub.s32 %v1555, %v1557
        %v1559 = vrot.slane %v1552, %v1558
        %v1560 = vcombine.low %v1470, %v1493
        %v1562 = vunpack.c.l.s4 1983009808
        %v1563 = vunpack.c.0.s8 %v1562
        %v1564 = vlaneseq
        %v1565 = vshrl.u32 %v1564, 7
        %v1566 = vsub.s32 %v1563, %v1565
        %v1567 = vrot.slane %v1560, %v1566
        %v1568 = vcombine.low %v1481, %v1505
        %v1570 = vunpack.c.l.s4 1983009808
        %v1571 = vunpack.c.0.s8 %v1570
        %v1572 = vlaneseq
        %v1573 = vshrl.u32 %v1572, 7
        %v1574 = vsub.s32 %v1571, %v1573
        %v1575 = vrot.slane %v1568, %v1574
        %v1576 = vcombine.low %v1567, %v1575
        %v1578 = vunpack.c.l.s4 1934713408
        %v1579 = vunpack.c.0.s8 %v1578
        %v1580 = vlaneseq
        %v1581 = vshrl.u32 %v1580, 7
        %v1582 = vsub.s32 %v1579, %v1581
        %v1583 = vrot.slane %v1576, %v1582
        %v1584 = vcombine.low %v1471, %v1495
        %v1586 = vunpack.c.l.s4 1983009808
        %v1587 = vunpack.c.0.s8 %v1586
        %v1588 = vlaneseq
        %v1589 = vshrl.u32 %v1588, 7
        %v1590 = vsub.s32 %v1587, %v1589
        %v1591 = vrot.slane %v1584, %v1590
        %v1592 = vcombine.low %v1483, %v1507
        %v1594 = vunpack.c.l.s4 1983009808
        %v1595 = vunpack.c.0.s8 %v1594
        %v1596 = vlaneseq
        %v1597 = vshrl.u32 %v1596, 7
        %v1598 = vsub.s32 %v1595, %v1597
        %v1599 = vrot.slane %v1592, %v1598
        %v1600 = vcombine.low %v1591, %v1599
        %v1602 = vunpack.c.l.s4 1934713408
        %v1603 = vunpack.c.0.s8 %v1602
        %v1604 = vlaneseq
        %v1605 = vshrl.u32 %v1604, 7
        %v1606 = vsub.s32 %v1603, %v1605
        %v1607 = vrot.slane %v1600, %v1606
        %v1608 = vld [vmem:[%s1327 + $0x2] sm:$0x1]
        %v1609 = vld [vmem:[%s1327 + $0x6] sm:$0x1]
        %v1610 = vld [vmem:[%s1327 + $0xa] sm:$0x1]
        %v1611 = vld [vmem:[%s1327 + $0xe] sm:$0x1]
        %1616 = vrot.lane.b32.xlu0 %v1608, 124
        %v1617 = vpop.permute.xlu0 %1616
        %1618 = vrot.lane.b32.xlu0 %v1609, 124
        %v1619 = vpop.permute.xlu0 %1618
        %1620 = vrot.lane.b32.xlu0 %v1610, 124
        %v1621 = vpop.permute.xlu0 %1620
        %1622 = vrot.lane.b32.xlu0 %v1611, 124
        %v1623 = vpop.permute.xlu0 %1622
        %1628 = vrot.lane.b32.xlu0 %v1608, 120
        %v1629 = vpop.permute.xlu0 %1628
        %1630 = vrot.lane.b32.xlu0 %v1609, 120
        %v1631 = vpop.permute.xlu0 %1630
        %1632 = vrot.lane.b32.xlu0 %v1610, 120
        %v1633 = vpop.permute.xlu0 %1632
        %1634 = vrot.lane.b32.xlu0 %v1611, 120
        %v1635 = vpop.permute.xlu0 %1634
        %1640 = vrot.lane.b32.xlu0 %v1608, 116
        %v1641 = vpop.permute.xlu0 %1640
        %1642 = vrot.lane.b32.xlu0 %v1609, 116
        %v1643 = vpop.permute.xlu0 %1642
        %1644 = vrot.lane.b32.xlu0 %v1610, 116
        %v1645 = vpop.permute.xlu0 %1644
        %1646 = vrot.lane.b32.xlu0 %v1611, 116
        %v1647 = vpop.permute.xlu0 %1646
        %v1652 = vcombine.low %v1608, %v1629
        %v1654 = vunpack.c.l.s4 1983009808
        %v1655 = vunpack.c.0.s8 %v1654
        %v1656 = vlaneseq
        %v1657 = vshrl.u32 %v1656, 7
        %v1658 = vsub.s32 %v1655, %v1657
        %v1659 = vrot.slane %v1652, %v1658
        %v1660 = vcombine.low %v1617, %v1641
        %v1662 = vunpack.c.l.s4 1983009808
        %v1663 = vunpack.c.0.s8 %v1662
        %v1664 = vlaneseq
        %v1665 = vshrl.u32 %v1664, 7
        %v1666 = vsub.s32 %v1663, %v1665
        %v1667 = vrot.slane %v1660, %v1666
        %v1668 = vcombine.low %v1659, %v1667
        %v1670 = vunpack.c.l.s4 1934713408
        %v1671 = vunpack.c.0.s8 %v1670
        %v1672 = vlaneseq
        %v1673 = vshrl.u32 %v1672, 7
        %v1674 = vsub.s32 %v1671, %v1673
        %v1675 = vrot.slane %v1668, %v1674
        %v1676 = vcombine.low %v1609, %v1631
        %v1678 = vunpack.c.l.s4 1983009808
        %v1679 = vunpack.c.0.s8 %v1678
        %v1680 = vlaneseq
        %v1681 = vshrl.u32 %v1680, 7
        %v1682 = vsub.s32 %v1679, %v1681
        %v1683 = vrot.slane %v1676, %v1682
        %v1684 = vcombine.low %v1619, %v1643
        %v1686 = vunpack.c.l.s4 1983009808
        %v1687 = vunpack.c.0.s8 %v1686
        %v1688 = vlaneseq
        %v1689 = vshrl.u32 %v1688, 7
        %v1690 = vsub.s32 %v1687, %v1689
        %v1691 = vrot.slane %v1684, %v1690
        %v1692 = vcombine.low %v1683, %v1691
        %v1694 = vunpack.c.l.s4 1934713408
        %v1695 = vunpack.c.0.s8 %v1694
        %v1696 = vlaneseq
        %v1697 = vshrl.u32 %v1696, 7
        %v1698 = vsub.s32 %v1695, %v1697
        %v1699 = vrot.slane %v1692, %v1698
        %v1700 = vcombine.low %v1610, %v1633
        %v1702 = vunpack.c.l.s4 1983009808
        %v1703 = vunpack.c.0.s8 %v1702
        %v1704 = vlaneseq
        %v1705 = vshrl.u32 %v1704, 7
        %v1706 = vsub.s32 %v1703, %v1705
        %v1707 = vrot.slane %v1700, %v1706
        %v1708 = vcombine.low %v1621, %v1645
        %v1710 = vunpack.c.l.s4 1983009808
        %v1711 = vunpack.c.0.s8 %v1710
        %v1712 = vlaneseq
        %v1713 = vshrl.u32 %v1712, 7
        %v1714 = vsub.s32 %v1711, %v1713
        %v1715 = vrot.slane %v1708, %v1714
        %v1716 = vcombine.low %v1707, %v1715
        %v1718 = vunpack.c.l.s4 1934713408
        %v1719 = vunpack.c.0.s8 %v1718
        %v1720 = vlaneseq
        %v1721 = vshrl.u32 %v1720, 7
        %v1722 = vsub.s32 %v1719, %v1721
        %v1723 = vrot.slane %v1716, %v1722
        %v1724 = vcombine.low %v1611, %v1635
        %v1726 = vunpack.c.l.s4 1983009808
        %v1727 = vunpack.c.0.s8 %v1726
        %v1728 = vlaneseq
        %v1729 = vshrl.u32 %v1728, 7
        %v1730 = vsub.s32 %v1727, %v1729
        %v1731 = vrot.slane %v1724, %v1730
        %v1732 = vcombine.low %v1623, %v1647
        %v1734 = vunpack.c.l.s4 1983009808
        %v1735 = vunpack.c.0.s8 %v1734
        %v1736 = vlaneseq
        %v1737 = vshrl.u32 %v1736, 7
        %v1738 = vsub.s32 %v1735, %v1737
        %v1739 = vrot.slane %v1732, %v1738
        %v1740 = vcombine.low %v1731, %v1739
        %v1742 = vunpack.c.l.s4 1934713408
        %v1743 = vunpack.c.0.s8 %v1742
        %v1744 = vlaneseq
        %v1745 = vshrl.u32 %v1744, 7
        %v1746 = vsub.s32 %v1743, %v1745
        %v1747 = vrot.slane %v1740, %v1746
        %v1748 = vld [vmem:[%s1327 + $0x3] sm:$0x1]
        %v1749 = vld [vmem:[%s1327 + $0x7] sm:$0x1]
        %v1750 = vld [vmem:[%s1327 + $0xb] sm:$0x1]
        %v1751 = vld [vmem:[%s1327 + $0xf] sm:$0x1]
        %1756 = vrot.lane.b32.xlu0 %v1748, 124
        %v1757 = vpop.permute.xlu0 %1756
        %1758 = vrot.lane.b32.xlu0 %v1749, 124
        %v1759 = vpop.permute.xlu0 %1758
        %1760 = vrot.lane.b32.xlu0 %v1750, 124
        %v1761 = vpop.permute.xlu0 %1760
        %1762 = vrot.lane.b32.xlu0 %v1751, 124
        %v1763 = vpop.permute.xlu0 %1762
        %1768 = vrot.lane.b32.xlu0 %v1748, 120
        %v1769 = vpop.permute.xlu0 %1768
        %1770 = vrot.lane.b32.xlu0 %v1749, 120
        %v1771 = vpop.permute.xlu0 %1770
        %1772 = vrot.lane.b32.xlu0 %v1750, 120
        %v1773 = vpop.permute.xlu0 %1772
        %1774 = vrot.lane.b32.xlu0 %v1751, 120
        %v1775 = vpop.permute.xlu0 %1774
        %1780 = vrot.lane.b32.xlu0 %v1748, 116
        %v1781 = vpop.permute.xlu0 %1780
        %1782 = vrot.lane.b32.xlu0 %v1749, 116
        %v1783 = vpop.permute.xlu0 %1782
        %1784 = vrot.lane.b32.xlu0 %v1750, 116
        %v1785 = vpop.permute.xlu0 %1784
        %1786 = vrot.lane.b32.xlu0 %v1751, 116
        %v1787 = vpop.permute.xlu0 %1786
        %v1792 = vcombine.low %v1748, %v1769
        %v1794 = vunpack.c.l.s4 1983009808
        %v1795 = vunpack.c.0.s8 %v1794
        %v1796 = vlaneseq
        %v1797 = vshrl.u32 %v1796, 7
        %v1798 = vsub.s32 %v1795, %v1797
        %v1799 = vrot.slane %v1792, %v1798
        %v1800 = vcombine.low %v1757, %v1781
        %v1802 = vunpack.c.l.s4 1983009808
        %v1803 = vunpack.c.0.s8 %v1802
        %v1804 = vlaneseq
        %v1805 = vshrl.u32 %v1804, 7
        %v1806 = vsub.s32 %v1803, %v1805
        %v1807 = vrot.slane %v1800, %v1806
        %v1808 = vcombine.low %v1799, %v1807
        %v1810 = vunpack.c.l.s4 1934713408
        %v1811 = vunpack.c.0.s8 %v1810
        %v1812 = vlaneseq
        %v1813 = vshrl.u32 %v1812, 7
        %v1814 = vsub.s32 %v1811, %v1813
        %v1815 = vrot.slane %v1808, %v1814
        %v1816 = vcombine.low %v1749, %v1771
        %v1818 = vunpack.c.l.s4 1983009808
        %v1819 = vunpack.c.0.s8 %v1818
        %v1820 = vlaneseq
        %v1821 = vshrl.u32 %v1820, 7
        %v1822 = vsub.s32 %v1819, %v1821
        %v1823 = vrot.slane %v1816, %v1822
        %v1824 = vcombine.low %v1759, %v1783
        %v1826 = vunpack.c.l.s4 1983009808
        %v1827 = vunpack.c.0.s8 %v1826
        %v1828 = vlaneseq
        %v1829 = vshrl.u32 %v1828, 7
        %v1830 = vsub.s32 %v1827, %v1829
        %v1831 = vrot.slane %v1824, %v1830
        %v1832 = vcombine.low %v1823, %v1831
        %v1834 = vunpack.c.l.s4 1934713408
        %v1835 = vunpack.c.0.s8 %v1834
        %v1836 = vlaneseq
        %v1837 = vshrl.u32 %v1836, 7
        %v1838 = vsub.s32 %v1835, %v1837
        %v1839 = vrot.slane %v1832, %v1838
        %v1840 = vcombine.low %v1750, %v1773
        %v1842 = vunpack.c.l.s4 1983009808
        %v1843 = vunpack.c.0.s8 %v1842
        %v1844 = vlaneseq
        %v1845 = vshrl.u32 %v1844, 7
        %v1846 = vsub.s32 %v1843, %v1845
        %v1847 = vrot.slane %v1840, %v1846
        %v1848 = vcombine.low %v1761, %v1785
        %v1850 = vunpack.c.l.s4 1983009808
        %v1851 = vunpack.c.0.s8 %v1850
        %v1852 = vlaneseq
        %v1853 = vshrl.u32 %v1852, 7
        %v1854 = vsub.s32 %v1851, %v1853
        %v1855 = vrot.slane %v1848, %v1854
        %v1856 = vcombine.low %v1847, %v1855
        %v1858 = vunpack.c.l.s4 1934713408
        %v1859 = vunpack.c.0.s8 %v1858
        %v1860 = vlaneseq
        %v1861 = vshrl.u32 %v1860, 7
        %v1862 = vsub.s32 %v1859, %v1861
        %v1863 = vrot.slane %v1856, %v1862
        %v1864 = vcombine.low %v1751, %v1775
        %v1866 = vunpack.c.l.s4 1983009808
        %v1867 = vunpack.c.0.s8 %v1866
        %v1868 = vlaneseq
        %v1869 = vshrl.u32 %v1868, 7
        %v1870 = vsub.s32 %v1867, %v1869
        %v1871 = vrot.slane %v1864, %v1870
        %v1872 = vcombine.low %v1763, %v1787
        %v1874 = vunpack.c.l.s4 1983009808
        %v1875 = vunpack.c.0.s8 %v1874
        %v1876 = vlaneseq
        %v1877 = vshrl.u32 %v1876, 7
        %v1878 = vsub.s32 %v1875, %v1877
        %v1879 = vrot.slane %v1872, %v1878
        %v1880 = vcombine.low %v1871, %v1879
        %v1882 = vunpack.c.l.s4 1934713408
        %v1883 = vunpack.c.0.s8 %v1882
        %v1884 = vlaneseq
        %v1885 = vshrl.u32 %v1884, 7
        %v1886 = vsub.s32 %v1883, %v1885
        %v1887 = vrot.slane %v1880, %v1886
        %s1888 = scalar_lea.vmem %s178, 48 [#allocation2]
        %v1889 = vld [vmem:[%s1888] sm:$0x1]
        %v1890 = vld [vmem:[%s1888 + $0x4] sm:$0x1]
        %v1891 = vld [vmem:[%s1888 + $0x8] sm:$0x1]
        %v1892 = vld [vmem:[%s1888 + $0xc] sm:$0x1]
        %1897 = vrot.lane.b32.xlu0 %v1889, 124
        %v1898 = vpop.permute.xlu0 %1897
        %1899 = vrot.lane.b32.xlu0 %v1890, 124
        %v1900 = vpop.permute.xlu0 %1899
        %1901 = vrot.lane.b32.xlu0 %v1891, 124
        %v1902 = vpop.permute.xlu0 %1901
        %1903 = vrot.lane.b32.xlu0 %v1892, 124
        %v1904 = vpop.permute.xlu0 %1903
        %1909 = vrot.lane.b32.xlu0 %v1889, 120
        %v1910 = vpop.permute.xlu0 %1909
        %1911 = vrot.lane.b32.xlu0 %v1890, 120
        %v1912 = vpop.permute.xlu0 %1911
        %1913 = vrot.lane.b32.xlu0 %v1891, 120
        %v1914 = vpop.permute.xlu0 %1913
        %1915 = vrot.lane.b32.xlu0 %v1892, 120
        %v1916 = vpop.permute.xlu0 %1915
        %1921 = vrot.lane.b32.xlu0 %v1889, 116
        %v1922 = vpop.permute.xlu0 %1921
        %1923 = vrot.lane.b32.xlu0 %v1890, 116
        %v1924 = vpop.permute.xlu0 %1923
        %1925 = vrot.lane.b32.xlu0 %v1891, 116
        %v1926 = vpop.permute.xlu0 %1925
        %1927 = vrot.lane.b32.xlu0 %v1892, 116
        %v1928 = vpop.permute.xlu0 %1927
        %v1933 = vcombine.low %v1889, %v1910
        %v1935 = vunpack.c.l.s4 1983009808
        %v1936 = vunpack.c.0.s8 %v1935
        %v1937 = vlaneseq
        %v1938 = vshrl.u32 %v1937, 7
        %v1939 = vsub.s32 %v1936, %v1938
        %v1940 = vrot.slane %v1933, %v1939
        %v1941 = vcombine.low %v1898, %v1922
        %v1943 = vunpack.c.l.s4 1983009808
        %v1944 = vunpack.c.0.s8 %v1943
        %v1945 = vlaneseq
        %v1946 = vshrl.u32 %v1945, 7
        %v1947 = vsub.s32 %v1944, %v1946
        %v1948 = vrot.slane %v1941, %v1947
        %v1949 = vcombine.low %v1940, %v1948
        %v1951 = vunpack.c.l.s4 1934713408
        %v1952 = vunpack.c.0.s8 %v1951
        %v1953 = vlaneseq
        %v1954 = vshrl.u32 %v1953, 7
        %v1955 = vsub.s32 %v1952, %v1954
        %v1956 = vrot.slane %v1949, %v1955
        %v1957 = vcombine.low %v1890, %v1912
        %v1959 = vunpack.c.l.s4 1983009808
        %v1960 = vunpack.c.0.s8 %v1959
        %v1961 = vlaneseq
        %v1962 = vshrl.u32 %v1961, 7
        %v1963 = vsub.s32 %v1960, %v1962
        %v1964 = vrot.slane %v1957, %v1963
        %v1965 = vcombine.low %v1900, %v1924
        %v1967 = vunpack.c.l.s4 1983009808
        %v1968 = vunpack.c.0.s8 %v1967
        %v1969 = vlaneseq
        %v1970 = vshrl.u32 %v1969, 7
        %v1971 = vsub.s32 %v1968, %v1970
        %v1972 = vrot.slane %v1965, %v1971
        %v1973 = vcombine.low %v1964, %v1972
        %v1975 = vunpack.c.l.s4 1934713408
        %v1976 = vunpack.c.0.s8 %v1975
        %v1977 = vlaneseq
        %v1978 = vshrl.u32 %v1977, 7
        %v1979 = vsub.s32 %v1976, %v1978
        %v1980 = vrot.slane %v1973, %v1979
        %v1981 = vcombine.low %v1891, %v1914
        %v1983 = vunpack.c.l.s4 1983009808
        %v1984 = vunpack.c.0.s8 %v1983
        %v1985 = vlaneseq
        %v1986 = vshrl.u32 %v1985, 7
        %v1987 = vsub.s32 %v1984, %v1986
        %v1988 = vrot.slane %v1981, %v1987
        %v1989 = vcombine.low %v1902, %v1926
        %v1991 = vunpack.c.l.s4 1983009808
        %v1992 = vunpack.c.0.s8 %v1991
        %v1993 = vlaneseq
        %v1994 = vshrl.u32 %v1993, 7
        %v1995 = vsub.s32 %v1992, %v1994
        %v1996 = vrot.slane %v1989, %v1995
        %v1997 = vcombine.low %v1988, %v1996
        %v1999 = vunpack.c.l.s4 1934713408
        %v2000 = vunpack.c.0.s8 %v1999
        %v2001 = vlaneseq
        %v2002 = vshrl.u32 %v2001, 7
        %v2003 = vsub.s32 %v2000, %v2002
        %v2004 = vrot.slane %v1997, %v2003
        %v2005 = vcombine.low %v1892, %v1916
        %v2007 = vunpack.c.l.s4 1983009808
        %v2008 = vunpack.c.0.s8 %v2007
        %v2009 = vlaneseq
        %v2010 = vshrl.u32 %v2009, 7
        %v2011 = vsub.s32 %v2008, %v2010
        %v2012 = vrot.slane %v2005, %v2011
        %v2013 = vcombine.low %v1904, %v1928
        %v2015 = vunpack.c.l.s4 1983009808
        %v2016 = vunpack.c.0.s8 %v2015
        %v2017 = vlaneseq
        %v2018 = vshrl.u32 %v2017, 7
        %v2019 = vsub.s32 %v2016, %v2018
        %v2020 = vrot.slane %v2013, %v2019
        %v2021 = vcombine.low %v2012, %v2020
        %v2023 = vunpack.c.l.s4 1934713408
        %v2024 = vunpack.c.0.s8 %v2023
        %v2025 = vlaneseq
        %v2026 = vshrl.u32 %v2025, 7
        %v2027 = vsub.s32 %v2024, %v2026
        %v2028 = vrot.slane %v2021, %v2027
        %v2029 = vld [vmem:[%s1888 + $0x1] sm:$0x1]
        %v2030 = vld [vmem:[%s1888 + $0x5] sm:$0x1]
        %v2031 = vld [vmem:[%s1888 + $0x9] sm:$0x1]
        %v2032 = vld [vmem:[%s1888 + $0xd] sm:$0x1]
        %2037 = vrot.lane.b32.xlu0 %v2029, 124
        %v2038 = vpop.permute.xlu0 %2037
        %2039 = vrot.lane.b32.xlu0 %v2030, 124
        %v2040 = vpop.permute.xlu0 %2039
        %2041 = vrot.lane.b32.xlu0 %v2031, 124
        %v2042 = vpop.permute.xlu0 %2041
        %2043 = vrot.lane.b32.xlu0 %v2032, 124
        %v2044 = vpop.permute.xlu0 %2043
        %2049 = vrot.lane.b32.xlu0 %v2029, 120
        %v2050 = vpop.permute.xlu0 %2049
        %2051 = vrot.lane.b32.xlu0 %v2030, 120
        %v2052 = vpop.permute.xlu0 %2051
        %2053 = vrot.lane.b32.xlu0 %v2031, 120
        %v2054 = vpop.permute.xlu0 %2053
        %2055 = vrot.lane.b32.xlu0 %v2032, 120
        %v2056 = vpop.permute.xlu0 %2055
        %2061 = vrot.lane.b32.xlu0 %v2029, 116
        %v2062 = vpop.permute.xlu0 %2061
        %2063 = vrot.lane.b32.xlu0 %v2030, 116
        %v2064 = vpop.permute.xlu0 %2063
        %2065 = vrot.lane.b32.xlu0 %v2031, 116
        %v2066 = vpop.permute.xlu0 %2065
        %2067 = vrot.lane.b32.xlu0 %v2032, 116
        %v2068 = vpop.permute.xlu0 %2067
        %v2073 = vcombine.low %v2029, %v2050
        %v2075 = vunpack.c.l.s4 1983009808
        %v2076 = vunpack.c.0.s8 %v2075
        %v2077 = vlaneseq
        %v2078 = vshrl.u32 %v2077, 7
        %v2079 = vsub.s32 %v2076, %v2078
        %v2080 = vrot.slane %v2073, %v2079
        %v2081 = vcombine.low %v2038, %v2062
        %v2083 = vunpack.c.l.s4 1983009808
        %v2084 = vunpack.c.0.s8 %v2083
        %v2085 = vlaneseq
        %v2086 = vshrl.u32 %v2085, 7
        %v2087 = vsub.s32 %v2084, %v2086
        %v2088 = vrot.slane %v2081, %v2087
        %v2089 = vcombine.low %v2080, %v2088
        %v2091 = vunpack.c.l.s4 1934713408
        %v2092 = vunpack.c.0.s8 %v2091
        %v2093 = vlaneseq
        %v2094 = vshrl.u32 %v2093, 7
        %v2095 = vsub.s32 %v2092, %v2094
        %v2096 = vrot.slane %v2089, %v2095
        %v2097 = vcombine.low %v2030, %v2052
        %v2099 = vunpack.c.l.s4 1983009808
        %v2100 = vunpack.c.0.s8 %v2099
        %v2101 = vlaneseq
        %v2102 = vshrl.u32 %v2101, 7
        %v2103 = vsub.s32 %v2100, %v2102
        %v2104 = vrot.slane %v2097, %v2103
        %v2105 = vcombine.low %v2040, %v2064
        %v2107 = vunpack.c.l.s4 1983009808
        %v2108 = vunpack.c.0.s8 %v2107
        %v2109 = vlaneseq
        %v2110 = vshrl.u32 %v2109, 7
        %v2111 = vsub.s32 %v2108, %v2110
        %v2112 = vrot.slane %v2105, %v2111
        %v2113 = vcombine.low %v2104, %v2112
        %v2115 = vunpack.c.l.s4 1934713408
        %v2116 = vunpack.c.0.s8 %v2115
        %v2117 = vlaneseq
        %v2118 = vshrl.u32 %v2117, 7
        %v2119 = vsub.s32 %v2116, %v2118
        %v2120 = vrot.slane %v2113, %v2119
        %v2121 = vcombine.low %v2031, %v2054
        %v2123 = vunpack.c.l.s4 1983009808
        %v2124 = vunpack.c.0.s8 %v2123
        %v2125 = vlaneseq
        %v2126 = vshrl.u32 %v2125, 7
        %v2127 = vsub.s32 %v2124, %v2126
        %v2128 = vrot.slane %v2121, %v2127
        %v2129 = vcombine.low %v2042, %v2066
        %v2131 = vunpack.c.l.s4 1983009808
        %v2132 = vunpack.c.0.s8 %v2131
        %v2133 = vlaneseq
        %v2134 = vshrl.u32 %v2133, 7
        %v2135 = vsub.s32 %v2132, %v2134
        %v2136 = vrot.slane %v2129, %v2135
        %v2137 = vcombine.low %v2128, %v2136
        %v2139 = vunpack.c.l.s4 1934713408
        %v2140 = vunpack.c.0.s8 %v2139
        %v2141 = vlaneseq
        %v2142 = vshrl.u32 %v2141, 7
        %v2143 = vsub.s32 %v2140, %v2142
        %v2144 = vrot.slane %v2137, %v2143
        %v2145 = vcombine.low %v2032, %v2056
        %v2147 = vunpack.c.l.s4 1983009808
        %v2148 = vunpack.c.0.s8 %v2147
        %v2149 = vlaneseq
        %v2150 = vshrl.u32 %v2149, 7
        %v2151 = vsub.s32 %v2148, %v2150
        %v2152 = vrot.slane %v2145, %v2151
        %v2153 = vcombine.low %v2044, %v2068
        %v2155 = vunpack.c.l.s4 1983009808
        %v2156 = vunpack.c.0.s8 %v2155
        %v2157 = vlaneseq
        %v2158 = vshrl.u32 %v2157, 7
        %v2159 = vsub.s32 %v2156, %v2158
        %v2160 = vrot.slane %v2153, %v2159
        %v2161 = vcombine.low %v2152, %v2160
        %v2163 = vunpack.c.l.s4 1934713408
        %v2164 = vunpack.c.0.s8 %v2163
        %v2165 = vlaneseq
        %v2166 = vshrl.u32 %v2165, 7
        %v2167 = vsub.s32 %v2164, %v2166
        %v2168 = vrot.slane %v2161, %v2167
        %v2169 = vld [vmem:[%s1888 + $0x2] sm:$0x1]
        %v2170 = vld [vmem:[%s1888 + $0x6] sm:$0x1]
        %v2171 = vld [vmem:[%s1888 + $0xa] sm:$0x1]
        %v2172 = vld [vmem:[%s1888 + $0xe] sm:$0x1]
        %2177 = vrot.lane.b32.xlu0 %v2169, 124
        %v2178 = vpop.permute.xlu0 %2177
        %2179 = vrot.lane.b32.xlu0 %v2170, 124
        %v2180 = vpop.permute.xlu0 %2179
        %2181 = vrot.lane.b32.xlu0 %v2171, 124
        %v2182 = vpop.permute.xlu0 %2181
        %2183 = vrot.lane.b32.xlu0 %v2172, 124
        %v2184 = vpop.permute.xlu0 %2183
        %2189 = vrot.lane.b32.xlu0 %v2169, 120
        %v2190 = vpop.permute.xlu0 %2189
        %2191 = vrot.lane.b32.xlu0 %v2170, 120
        %v2192 = vpop.permute.xlu0 %2191
        %2193 = vrot.lane.b32.xlu0 %v2171, 120
        %v2194 = vpop.permute.xlu0 %2193
        %2195 = vrot.lane.b32.xlu0 %v2172, 120
        %v2196 = vpop.permute.xlu0 %2195
        %2201 = vrot.lane.b32.xlu0 %v2169, 116
        %v2202 = vpop.permute.xlu0 %2201
        %2203 = vrot.lane.b32.xlu0 %v2170, 116
        %v2204 = vpop.permute.xlu0 %2203
        %2205 = vrot.lane.b32.xlu0 %v2171, 116
        %v2206 = vpop.permute.xlu0 %2205
        %2207 = vrot.lane.b32.xlu0 %v2172, 116
        %v2208 = vpop.permute.xlu0 %2207
        %v2213 = vcombine.low %v2169, %v2190
        %v2215 = vunpack.c.l.s4 1983009808
        %v2216 = vunpack.c.0.s8 %v2215
        %v2217 = vlaneseq
        %v2218 = vshrl.u32 %v2217, 7
        %v2219 = vsub.s32 %v2216, %v2218
        %v2220 = vrot.slane %v2213, %v2219
        %v2221 = vcombine.low %v2178, %v2202
        %v2223 = vunpack.c.l.s4 1983009808
        %v2224 = vunpack.c.0.s8 %v2223
        %v2225 = vlaneseq
        %v2226 = vshrl.u32 %v2225, 7
        %v2227 = vsub.s32 %v2224, %v2226
        %v2228 = vrot.slane %v2221, %v2227
        %v2229 = vcombine.low %v2220, %v2228
        %v2231 = vunpack.c.l.s4 1934713408
        %v2232 = vunpack.c.0.s8 %v2231
        %v2233 = vlaneseq
        %v2234 = vshrl.u32 %v2233, 7
        %v2235 = vsub.s32 %v2232, %v2234
        %v2236 = vrot.slane %v2229, %v2235
        %v2237 = vcombine.low %v2170, %v2192
        %v2239 = vunpack.c.l.s4 1983009808
        %v2240 = vunpack.c.0.s8 %v2239
        %v2241 = vlaneseq
        %v2242 = vshrl.u32 %v2241, 7
        %v2243 = vsub.s32 %v2240, %v2242
        %v2244 = vrot.slane %v2237, %v2243
        %v2245 = vcombine.low %v2180, %v2204
        %v2247 = vunpack.c.l.s4 1983009808
        %v2248 = vunpack.c.0.s8 %v2247
        %v2249 = vlaneseq
        %v2250 = vshrl.u32 %v2249, 7
        %v2251 = vsub.s32 %v2248, %v2250
        %v2252 = vrot.slane %v2245, %v2251
        %v2253 = vcombine.low %v2244, %v2252
        %v2255 = vunpack.c.l.s4 1934713408
        %v2256 = vunpack.c.0.s8 %v2255
        %v2257 = vlaneseq
        %v2258 = vshrl.u32 %v2257, 7
        %v2259 = vsub.s32 %v2256, %v2258
        %v2260 = vrot.slane %v2253, %v2259
        %v2261 = vcombine.low %v2171, %v2194
        %v2263 = vunpack.c.l.s4 1983009808
        %v2264 = vunpack.c.0.s8 %v2263
        %v2265 = vlaneseq
        %v2266 = vshrl.u32 %v2265, 7
        %v2267 = vsub.s32 %v2264, %v2266
        %v2268 = vrot.slane %v2261, %v2267
        %v2269 = vcombine.low %v2182, %v2206
        %v2271 = vunpack.c.l.s4 1983009808
        %v2272 = vunpack.c.0.s8 %v2271
        %v2273 = vlaneseq
        %v2274 = vshrl.u32 %v2273, 7
        %v2275 = vsub.s32 %v2272, %v2274
        %v2276 = vrot.slane %v2269, %v2275
        %v2277 = vcombine.low %v2268, %v2276
        %v2279 = vunpack.c.l.s4 1934713408
        %v2280 = vunpack.c.0.s8 %v2279
        %v2281 = vlaneseq
        %v2282 = vshrl.u32 %v2281, 7
        %v2283 = vsub.s32 %v2280, %v2282
        %v2284 = vrot.slane %v2277, %v2283
        %v2285 = vcombine.low %v2172, %v2196
        %v2287 = vunpack.c.l.s4 1983009808
        %v2288 = vunpack.c.0.s8 %v2287
        %v2289 = vlaneseq
        %v2290 = vshrl.u32 %v2289, 7
        %v2291 = vsub.s32 %v2288, %v2290
        %v2292 = vrot.slane %v2285, %v2291
        %v2293 = vcombine.low %v2184, %v2208
        %v2295 = vunpack.c.l.s4 1983009808
        %v2296 = vunpack.c.0.s8 %v2295
        %v2297 = vlaneseq
        %v2298 = vshrl.u32 %v2297, 7
        %v2299 = vsub.s32 %v2296, %v2298
        %v2300 = vrot.slane %v2293, %v2299
        %v2301 = vcombine.low %v2292, %v2300
        %v2303 = vunpack.c.l.s4 1934713408
        %v2304 = vunpack.c.0.s8 %v2303
        %v2305 = vlaneseq
        %v2306 = vshrl.u32 %v2305, 7
        %v2307 = vsub.s32 %v2304, %v2306
        %v2308 = vrot.slane %v2301, %v2307
        %v2309 = vld [vmem:[%s1888 + $0x3] sm:$0x1]
        %v2310 = vld [vmem:[%s1888 + $0x7] sm:$0x1]
        %v2311 = vld [vmem:[%s1888 + $0xb] sm:$0x1]
        %v2312 = vld [vmem:[%s1888 + $0xf] sm:$0x1]
        %2317 = vrot.lane.b32.xlu0 %v2309, 124
        %v2318 = vpop.permute.xlu0 %2317
        %2319 = vrot.lane.b32.xlu0 %v2310, 124
        %v2320 = vpop.permute.xlu0 %2319
        %2321 = vrot.lane.b32.xlu0 %v2311, 124
        %v2322 = vpop.permute.xlu0 %2321
        %2323 = vrot.lane.b32.xlu0 %v2312, 124
        %v2324 = vpop.permute.xlu0 %2323
        %2329 = vrot.lane.b32.xlu0 %v2309, 120
        %v2330 = vpop.permute.xlu0 %2329
        %2331 = vrot.lane.b32.xlu0 %v2310, 120
        %v2332 = vpop.permute.xlu0 %2331
        %2333 = vrot.lane.b32.xlu0 %v2311, 120
        %v2334 = vpop.permute.xlu0 %2333
        %2335 = vrot.lane.b32.xlu0 %v2312, 120
        %v2336 = vpop.permute.xlu0 %2335
        %2341 = vrot.lane.b32.xlu0 %v2309, 116
        %v2342 = vpop.permute.xlu0 %2341
        %2343 = vrot.lane.b32.xlu0 %v2310, 116
        %v2344 = vpop.permute.xlu0 %2343
        %2345 = vrot.lane.b32.xlu0 %v2311, 116
        %v2346 = vpop.permute.xlu0 %2345
        %2347 = vrot.lane.b32.xlu0 %v2312, 116
        %v2348 = vpop.permute.xlu0 %2347
        %v2353 = vcombine.low %v2309, %v2330
        %v2355 = vunpack.c.l.s4 1983009808
        %v2356 = vunpack.c.0.s8 %v2355
        %v2357 = vlaneseq
        %v2358 = vshrl.u32 %v2357, 7
        %v2359 = vsub.s32 %v2356, %v2358
        %v2360 = vrot.slane %v2353, %v2359
        %v2361 = vcombine.low %v2318, %v2342
        %v2363 = vunpack.c.l.s4 1983009808
        %v2364 = vunpack.c.0.s8 %v2363
        %v2365 = vlaneseq
        %v2366 = vshrl.u32 %v2365, 7
        %v2367 = vsub.s32 %v2364, %v2366
        %v2368 = vrot.slane %v2361, %v2367
        %v2369 = vcombine.low %v2360, %v2368
        %v2371 = vunpack.c.l.s4 1934713408
        %v2372 = vunpack.c.0.s8 %v2371
        %v2373 = vlaneseq
        %v2374 = vshrl.u32 %v2373, 7
        %v2375 = vsub.s32 %v2372, %v2374
        %v2376 = vrot.slane %v2369, %v2375
        %v2377 = vcombine.low %v2310, %v2332
        %v2379 = vunpack.c.l.s4 1983009808
        %v2380 = vunpack.c.0.s8 %v2379
        %v2381 = vlaneseq
        %v2382 = vshrl.u32 %v2381, 7
        %v2383 = vsub.s32 %v2380, %v2382
        %v2384 = vrot.slane %v2377, %v2383
        %v2385 = vcombine.low %v2320, %v2344
        %v2387 = vunpack.c.l.s4 1983009808
        %v2388 = vunpack.c.0.s8 %v2387
        %v2389 = vlaneseq
        %v2390 = vshrl.u32 %v2389, 7
        %v2391 = vsub.s32 %v2388, %v2390
        %v2392 = vrot.slane %v2385, %v2391
        %v2393 = vcombine.low %v2384, %v2392
        %v2395 = vunpack.c.l.s4 1934713408
        %v2396 = vunpack.c.0.s8 %v2395
        %v2397 = vlaneseq
        %v2398 = vshrl.u32 %v2397, 7
        %v2399 = vsub.s32 %v2396, %v2398
        %v2400 = vrot.slane %v2393, %v2399
        %v2401 = vcombine.low %v2311, %v2334
        %v2403 = vunpack.c.l.s4 1983009808
        %v2404 = vunpack.c.0.s8 %v2403
        %v2405 = vlaneseq
        %v2406 = vshrl.u32 %v2405, 7
        %v2407 = vsub.s32 %v2404, %v2406
        %v2408 = vrot.slane %v2401, %v2407
        %v2409 = vcombine.low %v2322, %v2346
        %v2411 = vunpack.c.l.s4 1983009808
        %v2412 = vunpack.c.0.s8 %v2411
        %v2413 = vlaneseq
        %v2414 = vshrl.u32 %v2413, 7
        %v2415 = vsub.s32 %v2412, %v2414
        %v2416 = vrot.slane %v2409, %v2415
        %v2417 = vcombine.low %v2408, %v2416
        %v2419 = vunpack.c.l.s4 1934713408
        %v2420 = vunpack.c.0.s8 %v2419
        %v2421 = vlaneseq
        %v2422 = vshrl.u32 %v2421, 7
        %v2423 = vsub.s32 %v2420, %v2422
        %v2424 = vrot.slane %v2417, %v2423
        %v2425 = vcombine.low %v2312, %v2336
        %v2427 = vunpack.c.l.s4 1983009808
        %v2428 = vunpack.c.0.s8 %v2427
        %v2429 = vlaneseq
        %v2430 = vshrl.u32 %v2429, 7
        %v2431 = vsub.s32 %v2428, %v2430
        %v2432 = vrot.slane %v2425, %v2431
        %v2433 = vcombine.low %v2324, %v2348
        %v2435 = vunpack.c.l.s4 1983009808
        %v2436 = vunpack.c.0.s8 %v2435
        %v2437 = vlaneseq
        %v2438 = vshrl.u32 %v2437, 7
        %v2439 = vsub.s32 %v2436, %v2438
        %v2440 = vrot.slane %v2433, %v2439
        %v2441 = vcombine.low %v2432, %v2440
        %v2443 = vunpack.c.l.s4 1934713408
        %v2444 = vunpack.c.0.s8 %v2443
        %v2445 = vlaneseq
        %v2446 = vshrl.u32 %v2445, 7
        %v2447 = vsub.s32 %v2444, %v2446
        %v2448 = vrot.slane %v2441, %v2447
        %2453 = vrot.lane.b32.xlu0 %v413, 4
        %v2454 = vpop.permute.xlu0 %2453
        %2455 = vrot.lane.b32.xlu0 %v437, 4
        %v2456 = vpop.permute.xlu0 %2455
        %2457 = vrot.lane.b32.xlu0 %v461, 4
        %v2458 = vpop.permute.xlu0 %2457
        %2459 = vrot.lane.b32.xlu0 %v485, 4
        %v2460 = vpop.permute.xlu0 %2459
        %2469 = vrot.lane.b32.xlu0 %v553, 8
        %v2470 = vpop.permute.xlu0 %2469
        %2471 = vrot.lane.b32.xlu0 %v577, 8
        %v2472 = vpop.permute.xlu0 %2471
        %2473 = vrot.lane.b32.xlu0 %v601, 8
        %v2474 = vpop.permute.xlu0 %2473
        %2475 = vrot.lane.b32.xlu0 %v625, 8
        %v2476 = vpop.permute.xlu0 %2475
        %2485 = vrot.lane.b32.xlu0 %v693, 12
        %v2486 = vpop.permute.xlu0 %2485
        %2487 = vrot.lane.b32.xlu0 %v717, 12
        %v2488 = vpop.permute.xlu0 %2487
        %2489 = vrot.lane.b32.xlu0 %v741, 12
        %v2490 = vpop.permute.xlu0 %2489
        %2491 = vrot.lane.b32.xlu0 %v765, 12
        %v2492 = vpop.permute.xlu0 %2491
        %2501 = vrot.lane.b32.xlu0 %v834, 16
        %v2502 = vpop.permute.xlu0 %2501
        %2503 = vrot.lane.b32.xlu0 %v858, 16
        %v2504 = vpop.permute.xlu0 %2503
        %2505 = vrot.lane.b32.xlu0 %v882, 16
        %v2506 = vpop.permute.xlu0 %2505
        %2507 = vrot.lane.b32.xlu0 %v906, 16
        %v2508 = vpop.permute.xlu0 %2507
        %2517 = vrot.lane.b32.xlu0 %v974, 20
        %v2518 = vpop.permute.xlu0 %2517
        %2519 = vrot.lane.b32.xlu0 %v998, 20
        %v2520 = vpop.permute.xlu0 %2519
        %2521 = vrot.lane.b32.xlu0 %v1022, 20
        %v2522 = vpop.permute.xlu0 %2521
        %2523 = vrot.lane.b32.xlu0 %v1046, 20
        %v2524 = vpop.permute.xlu0 %2523
        %2533 = vrot.lane.b32.xlu0 %v1114, 24
        %v2534 = vpop.permute.xlu0 %2533
        %2535 = vrot.lane.b32.xlu0 %v1138, 24
        %v2536 = vpop.permute.xlu0 %2535
        %2537 = vrot.lane.b32.xlu0 %v1162, 24
        %v2538 = vpop.permute.xlu0 %2537
        %2539 = vrot.lane.b32.xlu0 %v1186, 24
        %v2540 = vpop.permute.xlu0 %2539
        %2549 = vrot.lane.b32.xlu0 %v1254, 28
        %v2550 = vpop.permute.xlu0 %2549
        %2551 = vrot.lane.b32.xlu0 %v1278, 28
        %v2552 = vpop.permute.xlu0 %2551
        %2553 = vrot.lane.b32.xlu0 %v1302, 28
        %v2554 = vpop.permute.xlu0 %2553
        %2555 = vrot.lane.b32.xlu0 %v1326, 28
        %v2556 = vpop.permute.xlu0 %2555
        %2565 = vrot.lane.b32.xlu0 %v1395, 32
        %v2566 = vpop.permute.xlu0 %2565
        %2567 = vrot.lane.b32.xlu0 %v1419, 32
        %v2568 = vpop.permute.xlu0 %2567
        %2569 = vrot.lane.b32.xlu0 %v1443, 32
        %v2570 = vpop.permute.xlu0 %2569
        %2571 = vrot.lane.b32.xlu0 %v1467, 32
        %v2572 = vpop.permute.xlu0 %2571
        %2581 = vrot.lane.b32.xlu0 %v1535, 36
        %v2582 = vpop.permute.xlu0 %2581
        %2583 = vrot.lane.b32.xlu0 %v1559, 36
        %v2584 = vpop.permute.xlu0 %2583
        %2585 = vrot.lane.b32.xlu0 %v1583, 36
        %v2586 = vpop.permute.xlu0 %2585
        %2587 = vrot.lane.b32.xlu0 %v1607, 36
        %v2588 = vpop.permute.xlu0 %2587
        %2597 = vrot.lane.b32.xlu0 %v1675, 40
        %v2598 = vpop.permute.xlu0 %2597
        %2599 = vrot.lane.b32.xlu0 %v1699, 40
        %v2600 = vpop.permute.xlu0 %2599
        %2601 = vrot.lane.b32.xlu0 %v1723, 40
        %v2602 = vpop.permute.xlu0 %2601
        %2603 = vrot.lane.b32.xlu0 %v1747, 40
        %v2604 = vpop.permute.xlu0 %2603
        %2613 = vrot.lane.b32.xlu0 %v1815, 44
        %v2614 = vpop.permute.xlu0 %2613
        %2615 = vrot.lane.b32.xlu0 %v1839, 44
        %v2616 = vpop.permute.xlu0 %2615
        %2617 = vrot.lane.b32.xlu0 %v1863, 44
        %v2618 = vpop.permute.xlu0 %2617
        %2619 = vrot.lane.b32.xlu0 %v1887, 44
        %v2620 = vpop.permute.xlu0 %2619
        %2629 = vrot.lane.b32.xlu0 %v1956, 48
        %v2630 = vpop.permute.xlu0 %2629
        %2631 = vrot.lane.b32.xlu0 %v1980, 48
        %v2632 = vpop.permute.xlu0 %2631
        %2633 = vrot.lane.b32.xlu0 %v2004, 48
        %v2634 = vpop.permute.xlu0 %2633
        %2635 = vrot.lane.b32.xlu0 %v2028, 48
        %v2636 = vpop.permute.xlu0 %2635
        %2645 = vrot.lane.b32.xlu0 %v2096, 52
        %v2646 = vpop.permute.xlu0 %2645
        %2647 = vrot.lane.b32.xlu0 %v2120, 52
        %v2648 = vpop.permute.xlu0 %2647
        %2649 = vrot.lane.b32.xlu0 %v2144, 52
        %v2650 = vpop.permute.xlu0 %2649
        %2651 = vrot.lane.b32.xlu0 %v2168, 52
        %v2652 = vpop.permute.xlu0 %2651
        %2661 = vrot.lane.b32.xlu0 %v2236, 56
        %v2662 = vpop.permute.xlu0 %2661
        %2663 = vrot.lane.b32.xlu0 %v2260, 56
        %v2664 = vpop.permute.xlu0 %2663
        %2665 = vrot.lane.b32.xlu0 %v2284, 56
        %v2666 = vpop.permute.xlu0 %2665
        %2667 = vrot.lane.b32.xlu0 %v2308, 56
        %v2668 = vpop.permute.xlu0 %2667
        %2677 = vrot.lane.b32.xlu0 %v2376, 60
        %v2678 = vpop.permute.xlu0 %2677
        %2679 = vrot.lane.b32.xlu0 %v2400, 60
        %v2680 = vpop.permute.xlu0 %2679
        %2681 = vrot.lane.b32.xlu0 %v2424, 60
        %v2682 = vpop.permute.xlu0 %2681
        %2683 = vrot.lane.b32.xlu0 %v2448, 60
        %v2684 = vpop.permute.xlu0 %2683
        %vm2689 = vcmask 31744
        %v2690 = vsel %vm2689, %v273, %v2454
        %v2691 = vsel %vm2689, %v297, %v2456
        %v2692 = vsel %vm2689, %v321, %v2458
        %v2693 = vsel %vm2689, %v345, %v2460
        %vm2694 = vcmask 64512
        %v2695 = vsel %vm2694, %v2690, %v2470
        %v2696 = vsel %vm2694, %v2691, %v2472
        %v2697 = vsel %vm2694, %v2692, %v2474
        %v2698 = vsel %vm2694, %v2693, %v2476
        %vm2699 = vcmask 97280
        %v2700 = vsel %vm2699, %v2695, %v2486
        %v2701 = vsel %vm2699, %v2696, %v2488
        %v2702 = vsel %vm2699, %v2697, %v2490
        %v2703 = vsel %vm2699, %v2698, %v2492
        %vm2704 = vcmask 130048
        %v2705 = vsel %vm2704, %v2700, %v2502
        %v2706 = vsel %vm2704, %v2701, %v2504
        %v2707 = vsel %vm2704, %v2702, %v2506
        %v2708 = vsel %vm2704, %v2703, %v2508
        %vm2709 = vcmask 162816
        %v2710 = vsel %vm2709, %v2705, %v2518
        %v2711 = vsel %vm2709, %v2706, %v2520
        %v2712 = vsel %vm2709, %v2707, %v2522
        %v2713 = vsel %vm2709, %v2708, %v2524
        %vm2714 = vcmask 195584
        %v2715 = vsel %vm2714, %v2710, %v2534
        %v2716 = vsel %vm2714, %v2711, %v2536
        %v2717 = vsel %vm2714, %v2712, %v2538
        %v2718 = vsel %vm2714, %v2713, %v2540
        %vm2719 = vcmask 228352
        %v2720 = vsel %vm2719, %v2715, %v2550
        %v2721 = vsel %vm2719, %v2716, %v2552
        %v2722 = vsel %vm2719, %v2717, %v2554
        %v2723 = vsel %vm2719, %v2718, %v2556
        %vm2724 = vcmask 261120
        %v2725 = vsel %vm2724, %v2720, %v2566
        %v2726 = vsel %vm2724, %v2721, %v2568
        %v2727 = vsel %vm2724, %v2722, %v2570
        %v2728 = vsel %vm2724, %v2723, %v2572
        %vm2729 = vcmask 293888
        %v2730 = vsel %vm2729, %v2725, %v2582
        %v2731 = vsel %vm2729, %v2726, %v2584
        %v2732 = vsel %vm2729, %v2727, %v2586
        %v2733 = vsel %vm2729, %v2728, %v2588
        %vm2734 = vcmask 326656
        %v2735 = vsel %vm2734, %v2730, %v2598
        %v2736 = vsel %vm2734, %v2731, %v2600
        %v2737 = vsel %vm2734, %v2732, %v2602
        %v2738 = vsel %vm2734, %v2733, %v2604
        %vm2739 = vcmask 359424
        %v2740 = vsel %vm2739, %v2735, %v2614
        %v2741 = vsel %vm2739, %v2736, %v2616
        %v2742 = vsel %vm2739, %v2737, %v2618
        %v2743 = vsel %vm2739, %v2738, %v2620
        %vm2744 = vcmask 392192
        %v2745 = vsel %vm2744, %v2740, %v2630
        %v2746 = vsel %vm2744, %v2741, %v2632
        %v2747 = vsel %vm2744, %v2742, %v2634
        %v2748 = vsel %vm2744, %v2743, %v2636
        %vm2749 = vcmask 424960
        %v2750 = vsel %vm2749, %v2745, %v2646
        %v2751 = vsel %vm2749, %v2746, %v2648
        %v2752 = vsel %vm2749, %v2747, %v2650
        %v2753 = vsel %vm2749, %v2748, %v2652
        %vm2754 = vcmask 457728
        %v2755 = vsel %vm2754, %v2750, %v2662
        %v2756 = vsel %vm2754, %v2751, %v2664
        %v2757 = vsel %vm2754, %v2752, %v2666
        %v2758 = vsel %vm2754, %v2753, %v2668
        %vm2759 = vcmask 490496
        %v2760 = vsel %vm2759, %v2755, %v2678
        %v2761 = vsel %vm2759, %v2756, %v2680
        %v2762 = vsel %vm2759, %v2757, %v2682
        %v2763 = vsel %vm2759, %v2758, %v2684
        %v2764 = vld [vmem:[#allocation5] sm:$0xf]
        %v2765 = vld [vmem:[#allocation5 + $0x4] sm:$0xf]
        %v2766 = vld [vmem:[#allocation5 + $0x8] sm:$0xf]
        %v2767 = vld [vmem:[#allocation5 + $0xc] sm:$0xf]
        %v2768 = vadd.f32 %v2760, %v2764
        %v2769 = vadd.f32 %v2761, %v2765
        %v2770 = vadd.f32 %v2762, %v2766
        %v2771 = vadd.f32 %v2763, %v2767
        %vm2772 = vcmask 519168
        %2773 = vst.msk [vmem:[%s202] sm:$0xf] %vm2772, %v2768
        %2774 = vst.msk [vmem:[%s202 + $0x4] sm:$0xf] %vm2772, %v2769
        %2775 = vst.msk [vmem:[%s202 + $0x8] sm:$0xf] %vm2772, %v2770
        %2776 = vst.msk [vmem:[%s202 + $0xc] sm:$0xf] %vm2772, %v2771
        %s2777 = sand.u32 %s96, 1
        %s2778 = scalar_lea.sflag [#allocation4], %s2777
        %s2779 = sand.u32 %s96, 1
        %s2780 = smul.addr %s2779, 16
        %s2781 = scalar_lea.vmem [#allocation7], %s2780
        // Predicated region
        $region37: #{tpu_custom_call.1} parent=27 // pred_check
          %p2782 = pneg %p106
        $region38: #{tpu_custom_call.1} parent=27 // pred_check_branch
          %2784 = sbr.rel (%p2782) target = $region40
        $region39: #{tpu_custom_call.1} parent=27 // pred_region
          %s2785 = smul.u32 4, %s24
          %s2787 = ssub.s32 256, 256
          %2788 = vsyncadd %s2778, %s2787
          %s2789 = smul.addr %s25, 4
          %s2790 = sadd.s32 %s2785, %s2789
          %s2791 = smul.addr %s2790, 64
          %s2792 = scalar_lea.hbm %s2, %s2791
          %s2793 = sshll.u32 %s2781, 4
          %s2794 = int_to_ptr.vmem [resolvable:$true] %s2793
          %2799 = dma.vmem_to_hbm [thread:$0]  %s2794, 256, %s2792, %s2778, 64, 64, 4
        $region40: #{tpu_custom_call.1} parent=27 // pred_fallthru
          _
      $region28: #{tpu_custom_call.1} parent=5 // pred_fallthru
        _
      %p2800 = scmp.le.s32.totalorder 2, %s15
      // Predicated region
      $region41: #{tpu_custom_call.1} parent=5 // pred_check
        %p2801 = pneg %p2800
      $region42: #{tpu_custom_call.1} parent=5 // pred_check_branch
        %2803 = sbr.rel (%p2801) target = $region44
      $region43: #{tpu_custom_call.1} parent=5 // pred_region
        %s2804 = ssub.s32 %s15, 2
        // Predicated region
        $region45: #{tpu_custom_call.1} parent=43 // pred_check
          %p2805 = pneg %p112
        $region46: #{tpu_custom_call.1} parent=43 // pred_check_branch
          %2807 = sbr.rel (%p2805) target = $region48
        $region47: #{tpu_custom_call.1} parent=43 // pred_region
          %s2808 = sand.u32 %s97, 1
          %s2809 = scalar_lea.sflag [#allocation4], %s2808
          %s2810 = sand.u32 %s97, 1
          %s2811 = smul.addr %s2810, 16
          %s2812 = scalar_lea.vmem [#allocation7], %s2811
          %2813 = dma.done %s2809, 256
        $region48: #{tpu_custom_call.1} parent=43 // pred_fallthru
          _
      $region44: #{tpu_custom_call.1} parent=5 // pred_fallthru
        _
    $region6: #{tpu_custom_call.1} parent=1 // loop_footer
      %s19 = sadd.s32 1, %s15
    $region7: #{tpu_custom_call.1} parent=1 // loop_footer_branch
      %14 = sbr.rel target = $region3
    $region8: #{tpu_custom_call.1} parent=1 // loop_exit
      _
    %2814 = vsyncpa [#allocation3], 1
    %s2815 = scalar_lea.sflag [#allocation3], 1
    %2816 = vsyncpa %s2815, 1
    %2817 = vsyncpa [#allocation6], 1
    %2818 = vsyncpa [#allocation4], 1
    %s2819 = scalar_lea.sflag [#allocation4], 1
    %2820 = vsyncpa %s2819, 1

// kernel: tpu_custom_call.1
$region0: #{tpu_custom_call.1}
  #allocation0 [shape = 'u32[]', space=smem, size = 0x4, offset = 0x4, fixed_abs, tag = 'smem constant byte address 0x4 - core index']
  #allocation1 [shape = 'u32[144,128]{1,0:T(1,128)}', space=vmem, size = 0x12000, scoped, tag = 'internal scratch']
  %s0 = inlined_call_operand.hbm [shape: f32[2,4,4,4,4,4], index: 0, kind: input, shape index: {}]
  %s1 = inlined_call_operand.hbm [shape: f32[1,4,4,64], index: 1, kind: input, shape index: {}]
  %s2 = inlined_call_operand.hbm [shape: f32[2,4,4,64], index: 2, kind: output, shape index: {}]
  %s3 = sld [smem:[#allocation0]]
  $region49: #{tpu_custom_call.1} parent=0
    _
  %s5 = ssub.s32 1, %s3
  %s6 = scalar_select 0, %s5, %s3
  $region1: #{tpu_custom_call.1} parent=0
    #allocation2 [shape = 'u8[262144]{0}', space=vmem, size = 0x40000, scoped, tag = 'input window, operand 0']
    #allocation3 [shape = 's32[2]{0}', space=sflag, size = 0x8, scoped, tag = 'scoped memory for tpu_custom_call.1']
    #allocation4 [shape = 's32[2]{0}', space=sflag, size = 0x8, scoped, tag = 'scoped memory for tpu_custom_call.1']
    #allocation5 [shape = 'u8[8192]{0}', space=vmem, size = 0x2000, scoped, tag = 'input window, operand 1, single buffered']
    #allocation6 [shape = 's32[1]{0}', space=sflag, size = 0x4, scoped, tag = 'scoped memory for tpu_custom_call.1']
    #allocation7 [shape = 'u8[16384]{0}', space=vmem, size = 0x4000, scoped, tag = 'output window, operand 0']
    %7 = vsyncpa [#allocation3], 0
    %s8 = scalar_lea.sflag [#allocation3], 1
    %9 = vsyncpa %s8, 0
    %10 = vsyncpa [#allocation6], 0
    %11 = vsyncpa [#allocation4], 0
    %s12 = scalar_lea.sflag [#allocation4], 1
    %13 = vsyncpa %s12, 0
    loop: start=0, step=1, limit=4
    $region2: #{tpu_custom_call.1} parent=1 // loop_pre_header
      _
    $region3: #{tpu_custom_call.1} parent=1 // loop_header
      %s15 = sphi 0, %s19
      %p16 = scmp.ge.s32.totalorder %s15, 4
      %s22 = sphi 0, %s34
      %s23 = sphi 0, %s30
      %s24 = sphi 0, %s22
      %s25 = sphi 0, %s23
      %s26 = sphi 0, %s24
      %s27 = sphi 0, %s25
      %s39 = sphi 0, %s41
      %s42 = sphi 0, %s39
      %s43 = sphi 0, %s42
      %s59 = sphi 0, %s43
      %s65 = sphi 0, %s67
      %s68 = sphi 0, %s65
      %s69 = sphi 0, %s68
      %s85 = sphi 0, %s69
      %s93 = sphi 0, %s95
      %s96 = sphi 0, %s93
      %s97 = sphi 0, %s96
      %s113 = sphi 0, %s97
    $region4: #{tpu_custom_call.1} parent=1 // loop_header_branch
      %18 = sbr.rel (%p16) target = $region8
    $region5: #{tpu_custom_call.1} parent=1 // loop_body
      %s20 = ssub.s32 %s15, 1
      %s21 = ssub.s32 %s15, 2
      %s28 = sadd.s32 1, %s23
      %p29 = scmp.ge.s32.totalorder %s28, 2
      %s30 = scalar_select %p29, 0, %s28
      %s31 = sadd.s32 1, %s22
      %s32 = scalar_select %p29, %s31, %s22
      %p33 = scmp.ge.s32.totalorder %s32, 1
      %s34 = scalar_select %p33, 0, %s32
      %s35 = ssub.s32 %s23, %s30
      %s36 = ssub.s32 %s22, %s34
      %s37 = sor.u32 %s35, %s36
      %p38 = scmp.eq.s32.totalorder %s37, 0
      %s40 = sadd.s32 %s39, 1
      %s41 = scalar_select %p38, %s39, %s40
      %p44 = pneg %p38
      %p45 = scmp.eq.s32.totalorder %s15, 1
      %p46 = por %p44, %p45
      %p47 = scmp.ne.s32.totalorder %s39, %s42
      %p48 = scmp.eq.s32.totalorder %s15, 0
      %p49 = por %p47, %p48
      %p50 = scmp.ne.s32.totalorder %s39, %s42
      %p51 = scmp.eq.s32.totalorder %s20, 1
      %p52 = por %p50, %p51
      %p53 = scmp.ne.s32.totalorder %s42, %s43
      %p54 = scmp.eq.s32.totalorder %s20, 0
      %p55 = por %p53, %p54
      %p56 = scmp.ne.s32.totalorder %s42, %s43
      %p57 = scmp.eq.s32.totalorder %s21, 1
      %p58 = por %p56, %p57
      %p60 = scmp.ne.s32.totalorder %s43, %s59
      %p61 = scmp.eq.s32.totalorder %s21, 0
      %p62 = por %p60, %p61
      %s63 = ssub.s32 %s22, %s34
      %p64 = scmp.eq.s32.totalorder %s63, 0
      %s66 = sadd.s32 %s65, 1
      %s67 = scalar_select %p64, %s65, %s66
      %p70 = pneg %p64
      %p71 = scmp.eq.s32.totalorder %s15, 1
      %p72 = por %p70, %p71
      %p73 = scmp.ne.s32.totalorder %s65, %s68
      %p74 = scmp.eq.s32.totalorder %s15, 0
      %p75 = por %p73, %p74
      %p76 = scmp.ne.s32.totalorder %s65, %s68
      %p77 = scmp.eq.s32.totalorder %s20, 1
      %p78 = por %p76, %p77
      %p79 = scmp.ne.s32.totalorder %s68, %s69
      %p80 = scmp.eq.s32.totalorder %s20, 0
      %p81 = por %p79, %p80
      %p82 = scmp.ne.s32.totalorder %s68, %s69
      %p83 = scmp.eq.s32.totalorder %s21, 1
      %p84 = por %p82, %p83
      %p86 = scmp.ne.s32.totalorder %s69, %s85
      %p87 = scmp.eq.s32.totalorder %s21, 0
      %p88 = por %p86, %p87
      %s89 = ssub.s32 %s23, %s30
      %s90 = ssub.s32 %s22, %s34
      %s91 = sor.u32 %s89, %s90
      %p92 = scmp.eq.s32.totalorder %s91, 0
      %s94 = sadd.s32 %s93, 1
      %s95 = scalar_select %p92, %s93, %s94
      %p98 = pneg %p92
      %p99 = scmp.eq.s32.totalorder %s15, 1
      %p100 = por %p98, %p99
      %p101 = scmp.ne.s32.totalorder %s93, %s96
      %p102 = scmp.eq.s32.totalorder %s15, 0
      %p103 = por %p101, %p102
      %p104 = scmp.ne.s32.totalorder %s93, %s96
      %p105 = scmp.eq.s32.totalorder %s20, 1
      %p106 = por %p104, %p105
      %p107 = scmp.ne.s32.totalorder %s96, %s97
      %p108 = scmp.eq.s32.totalorder %s20, 0
      %p109 = por %p107, %p108
      %p110 = scmp.ne.s32.totalorder %s96, %s97
      %p111 = scmp.eq.s32.totalorder %s21, 1
      %p112 = por %p110, %p111
      %p114 = scmp.ne.s32.totalorder %s97, %s113
      %p115 = scmp.eq.s32.totalorder %s21, 0
      %p116 = por %p114, %p115
      %p117 = scmp.le.s32.totalorder 1, %s15
      %p118 = scmp.lt.s32.totalorder %s15, 3
      %p119 = pnand %p117, %p118
      %p120 = pneg %p119
      // Predicated region
      $region9: #{tpu_custom_call.1} parent=5 // pred_check
        _
      $region10: #{tpu_custom_call.1} parent=5 // pred_check_branch
        %122 = sbr.rel (%p119) target = $region12
      $region11: #{tpu_custom_call.1} parent=5 // pred_region
        %s123 = ssub.s32 %s15, 1
        // Predicated region
        $region13: #{tpu_custom_call.1} parent=11 // pred_check
          %p124 = pneg %p81
        $region14: #{tpu_custom_call.1} parent=11 // pred_check_branch
          %126 = sbr.rel (%p124) target = $region16
        $region15: #{tpu_custom_call.1} parent=11 // pred_region
          %s127 = smul.u32 4, %s24
          %s129 = ssub.s32 256, 256
          %130 = vsyncadd [#allocation6], %s129
          %s131 = smul.addr %s127, 64
          %s132 = scalar_lea.hbm %s1, %s131
          %s133 = sshll.u32 [#allocation5], 4
          %s134 = int_to_ptr.vmem [resolvable:$true] %s133
          %139 = dma.hbm_to_vmem [thread:$0]  %s132, 256, %s134, [#allocation6], 64, 64, 4
        $region16: #{tpu_custom_call.1} parent=11 // pred_fallthru
          _
      $region12: #{tpu_custom_call.1} parent=5 // pred_fallthru
        _
      %p140 = scmp.lt.s32.totalorder %s15, 2
      // Predicated region
      $region17: #{tpu_custom_call.1} parent=5 // pred_check
        %p141 = pneg %p140
      $region18: #{tpu_custom_call.1} parent=5 // pred_check_branch
        %143 = sbr.rel (%p141) target = $region20
      $region19: #{tpu_custom_call.1} parent=5 // pred_region
        // Predicated region
        $region21: #{tpu_custom_call.1} parent=19 // pred_check
          %p144 = pneg %p49
        $region22: #{tpu_custom_call.1} parent=19 // pred_check_branch
          %146 = sbr.rel (%p144) target = $region24
        $region23: #{tpu_custom_call.1} parent=19 // pred_region
          %s147 = sand.u32 %s39, 1
          %s148 = scalar_lea.sflag [#allocation3], %s147
          %s149 = sand.u32 %s39, 1
          %s150 = smul.addr %s149, 256
          %s151 = scalar_lea.vmem [#allocation2], %s150
          %s152 = smul.u32 4, %s22
          %s154 = ssub.s32 4096, 4096
          %155 = vsyncadd %s148, %s154
          %s156 = smul.addr %s152, 4
          %s157 = smul.addr %s23, 64
          %s158 = sadd.s32 %s156, %s157
          %s159 = smul.addr %s158, 64
          %s160 = scalar_lea.hbm %s0, %s159
          %s161 = sshll.u32 %s151, 4
          %s162 = int_to_ptr.vmem [resolvable:$true] %s161
          %167 = dma.hbm_to_vmem [thread:$0]  %s160, 4096, %s162, %s148, 64, 64, 4
        $region24: #{tpu_custom_call.1} parent=19 // pred_fallthru
          _
      $region20: #{tpu_custom_call.1} parent=5 // pred_fallthru
        _
      %p168 = scmp.le.s32.totalorder 1, %s15
      %p169 = scmp.lt.s32.totalorder %s15, 3
      %p170 = pnand %p168, %p169
      %p171 = pneg %p170
      // Predicated region
      $region25: #{tpu_custom_call.1} parent=5 // pred_check
        _
      $region26: #{tpu_custom_call.1} parent=5 // pred_check_branch
        %173 = sbr.rel (%p170) target = $region28
      $region27: #{tpu_custom_call.1} parent=5 // pred_region
        %s174 = ssub.s32 %s15, 1
        %s175 = sand.u32 %s42, 1
        %s176 = scalar_lea.sflag [#allocation3], %s175
        %s177 = sand.u32 %s42, 1
        %s178 = smul.addr %s177, 256
        %s179 = scalar_lea.vmem [#allocation2], %s178
        // Predicated region
        $region29: #{tpu_custom_call.1} parent=27 // pred_check
          %p180 = pneg %p55
        $region30: #{tpu_custom_call.1} parent=27 // pred_check_branch
          %182 = sbr.rel (%p180) target = $region32
        $region31: #{tpu_custom_call.1} parent=27 // pred_region
          %183 = dma.done %s176, 4096
        $region32: #{tpu_custom_call.1} parent=27 // pred_fallthru
          _
        // Predicated region
        $region33: #{tpu_custom_call.1} parent=27 // pred_check
          %p184 = pneg %p81
        $region34: #{tpu_custom_call.1} parent=27 // pred_check_branch
          %186 = sbr.rel (%p184) target = $region36
        $region35: #{tpu_custom_call.1} parent=27 // pred_region
          %187 = dma.done [#allocation6], 256
        $region36: #{tpu_custom_call.1} parent=27 // pred_fallthru
          _
        %s188 = sand.u32 %s42, 1
        %s189 = scalar_lea.sflag [#allocation3], %s188
        %s190 = sand.u32 %s42, 1
        %s191 = smul.addr %s190, 256
        %s192 = scalar_lea.vmem [#allocation2], %s191
        %p193 = pneg %p55
        %p194 = pneg %p52
        %p195 = pneg %p81
        %p196 = pneg %p78
        %p197 = pneg %p109
        %p198 = pneg %p106
        %s199 = sand.u32 %s96, 1
        %s200 = scalar_lea.sflag [#allocation4], %s199
        %s201 = sand.u32 %s96, 1
        %s202 = smul.addr %s201, 16
        %s203 = scalar_lea.vmem [#allocation7], %s202
        %s204 = smul.u32 4, %s24
        %s205 = smul.u32 4, %s24
        %s206 = smul.u32 4, %s24
        %v207 = vld [vmem:[%s179] sm:$0xf]
        %v208 = vld [vmem:[%s179 + $0x10] sm:$0xf]
        %v209 = vld [vmem:[%s179 + $0x20] sm:$0xf]
        %v210 = vld [vmem:[%s179 + $0x30] sm:$0xf]
        %s211 = scalar_lea.vmem %s179, 4 [#allocation2]
        %v212 = vld [vmem:[%s211] sm:$0xf]
        %v213 = vld [vmem:[%s211 + $0x10] sm:$0xf]
        %v214 = vld [vmem:[%s211 + $0x20] sm:$0xf]
        %v215 = vld [vmem:[%s211 + $0x30] sm:$0xf]
        %s216 = scalar_lea.vmem %s179, 8 [#allocation2]
        %v217 = vld [vmem:[%s216] sm:$0xf]
        %v218 = vld [vmem:[%s216 + $0x10] sm:$0xf]
        %v219 = vld [vmem:[%s216 + $0x20] sm:$0xf]
        %v220 = vld [vmem:[%s216 + $0x30] sm:$0xf]
        %s221 = scalar_lea.vmem %s179, 12 [#allocation2]
        %v222 = vld [vmem:[%s221] sm:$0xf]
        %v223 = vld [vmem:[%s221 + $0x10] sm:$0xf]
        %v224 = vld [vmem:[%s221 + $0x20] sm:$0xf]
        %v225 = vld [vmem:[%s221 + $0x30] sm:$0xf]
        %s226 = scalar_lea.vmem %s179, 64 [#allocation2]
        %v227 = vld [vmem:[%s226] sm:$0xf]
        %v228 = vld [vmem:[%s226 + $0x10] sm:$0xf]
        %v229 = vld [vmem:[%s226 + $0x20] sm:$0xf]
        %v230 = vld [vmem:[%s226 + $0x30] sm:$0xf]
        %s231 = scalar_lea.vmem %s179, 68 [#allocation2]
        %v232 = vld [vmem:[%s231] sm:$0xf]
        %v233 = vld [vmem:[%s231 + $0x10] sm:$0xf]
        %v234 = vld [vmem:[%s231 + $0x20] sm:$0xf]
        %v235 = vld [vmem:[%s231 + $0x30] sm:$0xf]
        %s236 = scalar_lea.vmem %s179, 72 [#allocation2]
        %v237 = vld [vmem:[%s236] sm:$0xf]
        %v238 = vld [vmem:[%s236 + $0x10] sm:$0xf]
        %v239 = vld [vmem:[%s236 + $0x20] sm:$0xf]
        %v240 = vld [vmem:[%s236 + $0x30] sm:$0xf]
        %s241 = scalar_lea.vmem %s179, 76 [#allocation2]
        %v242 = vld [vmem:[%s241] sm:$0xf]
        %v243 = vld [vmem:[%s241 + $0x10] sm:$0xf]
        %v244 = vld [vmem:[%s241 + $0x20] sm:$0xf]
        %v245 = vld [vmem:[%s241 + $0x30] sm:$0xf]
        %s246 = scalar_lea.vmem %s179, 128 [#allocation2]
        %v247 = vld [vmem:[%s246] sm:$0xf]
        %v248 = vld [vmem:[%s246 + $0x10] sm:$0xf]
        %v249 = vld [vmem:[%s246 + $0x20] sm:$0xf]
        %v250 = vld [vmem:[%s246 + $0x30] sm:$0xf]
        %s251 = scalar_lea.vmem %s179, 132 [#allocation2]
        %v252 = vld [vmem:[%s251] sm:$0xf]
        %v253 = vld [vmem:[%s251 + $0x10] sm:$0xf]
        %v254 = vld [vmem:[%s251 + $0x20] sm:$0xf]
        %v255 = vld [vmem:[%s251 + $0x30] sm:$0xf]
        %s256 = scalar_lea.vmem %s179, 136 [#allocation2]
        %v257 = vld [vmem:[%s256] sm:$0xf]
        %v258 = vld [vmem:[%s256 + $0x10] sm:$0xf]
        %v259 = vld [vmem:[%s256 + $0x20] sm:$0xf]
        %v260 = vld [vmem:[%s256 + $0x30] sm:$0xf]
        %s261 = scalar_lea.vmem %s179, 140 [#allocation2]
        %v262 = vld [vmem:[%s261] sm:$0xf]
        %v263 = vld [vmem:[%s261 + $0x10] sm:$0xf]
        %v264 = vld [vmem:[%s261 + $0x20] sm:$0xf]
        %v265 = vld [vmem:[%s261 + $0x30] sm:$0xf]
        %s266 = scalar_lea.vmem %s179, 192 [#allocation2]
        %v267 = vld [vmem:[%s266] sm:$0xf]
        %v268 = vld [vmem:[%s266 + $0x10] sm:$0xf]
        %v269 = vld [vmem:[%s266 + $0x20] sm:$0xf]
        %v270 = vld [vmem:[%s266 + $0x30] sm:$0xf]
        %s271 = scalar_lea.vmem %s179, 196 [#allocation2]
        %v272 = vld [vmem:[%s271] sm:$0xf]
        %v273 = vld [vmem:[%s271 + $0x10] sm:$0xf]
        %v274 = vld [vmem:[%s271 + $0x20] sm:$0xf]
        %v275 = vld [vmem:[%s271 + $0x30] sm:$0xf]
        %s276 = scalar_lea.vmem %s179, 200 [#allocation2]
        %v277 = vld [vmem:[%s276] sm:$0xf]
        %v278 = vld [vmem:[%s276 + $0x10] sm:$0xf]
        %v279 = vld [vmem:[%s276 + $0x20] sm:$0xf]
        %v280 = vld [vmem:[%s276 + $0x30] sm:$0xf]
        %s281 = scalar_lea.vmem %s179, 204 [#allocation2]
        %v282 = vld [vmem:[%s281] sm:$0xf]
        %v283 = vld [vmem:[%s281 + $0x10] sm:$0xf]
        %v284 = vld [vmem:[%s281 + $0x20] sm:$0xf]
        %v285 = vld [vmem:[%s281 + $0x30] sm:$0xf]
        %290 = vrot.lane.b32.xlu0 %v212, 4
        %v291 = vpop.permute.xlu0 %290
        %292 = vrot.lane.b32.xlu0 %v213, 4
        %v293 = vpop.permute.xlu0 %292
        %294 = vrot.lane.b32.xlu0 %v214, 4
        %v295 = vpop.permute.xlu0 %294
        %296 = vrot.lane.b32.xlu0 %v215, 4
        %v297 = vpop.permute.xlu0 %296
        %306 = vrot.lane.b32.xlu0 %v217, 8
        %v307 = vpop.permute.xlu0 %306
        %308 = vrot.lane.b32.xlu0 %v218, 8
        %v309 = vpop.permute.xlu0 %308
        %310 = vrot.lane.b32.xlu0 %v219, 8
        %v311 = vpop.permute.xlu0 %310
        %312 = vrot.lane.b32.xlu0 %v220, 8
        %v313 = vpop.permute.xlu0 %312
        %322 = vrot.lane.b32.xlu0 %v222, 12
        %v323 = vpop.permute.xlu0 %322
        %324 = vrot.lane.b32.xlu0 %v223, 12
        %v325 = vpop.permute.xlu0 %324
        %326 = vrot.lane.b32.xlu0 %v224, 12
        %v327 = vpop.permute.xlu0 %326
        %328 = vrot.lane.b32.xlu0 %v225, 12
        %v329 = vpop.permute.xlu0 %328
        %338 = vrot.lane.b32.xlu0 %v227, 16
        %v339 = vpop.permute.xlu0 %338
        %340 = vrot.lane.b32.xlu0 %v228, 16
        %v341 = vpop.permute.xlu0 %340
        %342 = vrot.lane.b32.xlu0 %v229, 16
        %v343 = vpop.permute.xlu0 %342
        %344 = vrot.lane.b32.xlu0 %v230, 16
        %v345 = vpop.permute.xlu0 %344
        %354 = vrot.lane.b32.xlu0 %v232, 20
        %v355 = vpop.permute.xlu0 %354
        %356 = vrot.lane.b32.xlu0 %v233, 20
        %v357 = vpop.permute.xlu0 %356
        %358 = vrot.lane.b32.xlu0 %v234, 20
        %v359 = vpop.permute.xlu0 %358
        %360 = vrot.lane.b32.xlu0 %v235, 20
        %v361 = vpop.permute.xlu0 %360
        %370 = vrot.lane.b32.xlu0 %v237, 24
        %v371 = vpop.permute.xlu0 %370
        %372 = vrot.lane.b32.xlu0 %v238, 24
        %v373 = vpop.permute.xlu0 %372
        %374 = vrot.lane.b32.xlu0 %v239, 24
        %v375 = vpop.permute.xlu0 %374
        %376 = vrot.lane.b32.xlu0 %v240, 24
        %v377 = vpop.permute.xlu0 %376
        %386 = vrot.lane.b32.xlu0 %v242, 28
        %v387 = vpop.permute.xlu0 %386
        %388 = vrot.lane.b32.xlu0 %v243, 28
        %v389 = vpop.permute.xlu0 %388
        %390 = vrot.lane.b32.xlu0 %v244, 28
        %v391 = vpop.permute.xlu0 %390
        %392 = vrot.lane.b32.xlu0 %v245, 28
        %v393 = vpop.permute.xlu0 %392
        %402 = vrot.lane.b32.xlu0 %v247, 32
        %v403 = vpop.permute.xlu0 %402
        %404 = vrot.lane.b32.xlu0 %v248, 32
        %v405 = vpop.permute.xlu0 %404
        %406 = vrot.lane.b32.xlu0 %v249, 32
        %v407 = vpop.permute.xlu0 %406
        %408 = vrot.lane.b32.xlu0 %v250, 32
        %v409 = vpop.permute.xlu0 %408
        %418 = vrot.lane.b32.xlu0 %v252, 36
        %v419 = vpop.permute.xlu0 %418
        %420 = vrot.lane.b32.xlu0 %v253, 36
        %v421 = vpop.permute.xlu0 %420
        %422 = vrot.lane.b32.xlu0 %v254, 36
        %v423 = vpop.permute.xlu0 %422
        %424 = vrot.lane.b32.xlu0 %v255, 36
        %v425 = vpop.permute.xlu0 %424
        %434 = vrot.lane.b32.xlu0 %v257, 40
        %v435 = vpop.permute.xlu0 %434
        %436 = vrot.lane.b32.xlu0 %v258, 40
        %v437 = vpop.permute.xlu0 %436
        %438 = vrot.lane.b32.xlu0 %v259, 40
        %v439 = vpop.permute.xlu0 %438
        %440 = vrot.lane.b32.xlu0 %v260, 40
        %v441 = vpop.permute.xlu0 %440
        %450 = vrot.lane.b32.xlu0 %v262, 44
        %v451 = vpop.permute.xlu0 %450
        %452 = vrot.lane.b32.xlu0 %v263, 44
        %v453 = vpop.permute.xlu0 %452
        %454 = vrot.lane.b32.xlu0 %v264, 44
        %v455 = vpop.permute.xlu0 %454
        %456 = vrot.lane.b32.xlu0 %v265, 44
        %v457 = vpop.permute.xlu0 %456
        %466 = vrot.lane.b32.xlu0 %v267, 48
        %v467 = vpop.permute.xlu0 %466
        %468 = vrot.lane.b32.xlu0 %v268, 48
        %v469 = vpop.permute.xlu0 %468
        %470 = vrot.lane.b32.xlu0 %v269, 48
        %v471 = vpop.permute.xlu0 %470
        %472 = vrot.lane.b32.xlu0 %v270, 48
        %v473 = vpop.permute.xlu0 %472
        %482 = vrot.lane.b32.xlu0 %v272, 52
        %v483 = vpop.permute.xlu0 %482
        %484 = vrot.lane.b32.xlu0 %v273, 52
        %v485 = vpop.permute.xlu0 %484
        %486 = vrot.lane.b32.xlu0 %v274, 52
        %v487 = vpop.permute.xlu0 %486
        %488 = vrot.lane.b32.xlu0 %v275, 52
        %v489 = vpop.permute.xlu0 %488
        %498 = vrot.lane.b32.xlu0 %v277, 56
        %v499 = vpop.permute.xlu0 %498
        %500 = vrot.lane.b32.xlu0 %v278, 56
        %v501 = vpop.permute.xlu0 %500
        %502 = vrot.lane.b32.xlu0 %v279, 56
        %v503 = vpop.permute.xlu0 %502
        %504 = vrot.lane.b32.xlu0 %v280, 56
        %v505 = vpop.permute.xlu0 %504
        %514 = vrot.lane.b32.xlu0 %v282, 60
        %v515 = vpop.permute.xlu0 %514
        %516 = vrot.lane.b32.xlu0 %v283, 60
        %v517 = vpop.permute.xlu0 %516
        %518 = vrot.lane.b32.xlu0 %v284, 60
        %v519 = vpop.permute.xlu0 %518
        %520 = vrot.lane.b32.xlu0 %v285, 60
        %v521 = vpop.permute.xlu0 %520
        %vm526 = vcmask 31744
        %v527 = vsel %vm526, %v207, %v291
        %v528 = vsel %vm526, %v208, %v293
        %v529 = vsel %vm526, %v209, %v295
        %v530 = vsel %vm526, %v210, %v297
        %vm531 = vcmask 64512
        %v532 = vsel %vm531, %v527, %v307
        %v533 = vsel %vm531, %v528, %v309
        %v534 = vsel %vm531, %v529, %v311
        %v535 = vsel %vm531, %v530, %v313
        %vm536 = vcmask 97280
        %v537 = vsel %vm536, %v532, %v323
        %v538 = vsel %vm536, %v533, %v325
        %v539 = vsel %vm536, %v534, %v327
        %v540 = vsel %vm536, %v535, %v329
        %vm541 = vcmask 130048
        %v542 = vsel %vm541, %v537, %v339
        %v543 = vsel %vm541, %v538, %v341
        %v544 = vsel %vm541, %v539, %v343
        %v545 = vsel %vm541, %v540, %v345
        %vm546 = vcmask 162816
        %v547 = vsel %vm546, %v542, %v355
        %v548 = vsel %vm546, %v543, %v357
        %v549 = vsel %vm546, %v544, %v359
        %v550 = vsel %vm546, %v545, %v361
        %vm551 = vcmask 195584
        %v552 = vsel %vm551, %v547, %v371
        %v553 = vsel %vm551, %v548, %v373
        %v554 = vsel %vm551, %v549, %v375
        %v555 = vsel %vm551, %v550, %v377
        %vm556 = vcmask 228352
        %v557 = vsel %vm556, %v552, %v387
        %v558 = vsel %vm556, %v553, %v389
        %v559 = vsel %vm556, %v554, %v391
        %v560 = vsel %vm556, %v555, %v393
        %vm561 = vcmask 261120
        %v562 = vsel %vm561, %v557, %v403
        %v563 = vsel %vm561, %v558, %v405
        %v564 = vsel %vm561, %v559, %v407
        %v565 = vsel %vm561, %v560, %v409
        %vm566 = vcmask 293888
        %v567 = vsel %vm566, %v562, %v419
        %v568 = vsel %vm566, %v563, %v421
        %v569 = vsel %vm566, %v564, %v423
        %v570 = vsel %vm566, %v565, %v425
        %vm571 = vcmask 326656
        %v572 = vsel %vm571, %v567, %v435
        %v573 = vsel %vm571, %v568, %v437
        %v574 = vsel %vm571, %v569, %v439
        %v575 = vsel %vm571, %v570, %v441
        %vm576 = vcmask 359424
        %v577 = vsel %vm576, %v572, %v451
        %v578 = vsel %vm576, %v573, %v453
        %v579 = vsel %vm576, %v574, %v455
        %v580 = vsel %vm576, %v575, %v457
        %vm581 = vcmask 392192
        %v582 = vsel %vm581, %v577, %v467
        %v583 = vsel %vm581, %v578, %v469
        %v584 = vsel %vm581, %v579, %v471
        %v585 = vsel %vm581, %v580, %v473
        %vm586 = vcmask 424960
        %v587 = vsel %vm586, %v582, %v483
        %v588 = vsel %vm586, %v583, %v485
        %v589 = vsel %vm586, %v584, %v487
        %v590 = vsel %vm586, %v585, %v489
        %vm591 = vcmask 457728
        %v592 = vsel %vm591, %v587, %v499
        %v593 = vsel %vm591, %v588, %v501
        %v594 = vsel %vm591, %v589, %v503
        %v595 = vsel %vm591, %v590, %v505
        %vm596 = vcmask 490496
        %v597 = vsel %vm596, %v592, %v515
        %v598 = vsel %vm596, %v593, %v517
        %v599 = vsel %vm596, %v594, %v519
        %v600 = vsel %vm596, %v595, %v521
        %v601 = vld [vmem:[#allocation5] sm:$0xf]
        %v602 = vld [vmem:[#allocation5 + $0x4] sm:$0xf]
        %v603 = vld [vmem:[#allocation5 + $0x8] sm:$0xf]
        %v604 = vld [vmem:[#allocation5 + $0xc] sm:$0xf]
        %v605 = vadd.f32 %v597, %v601
        %v606 = vadd.f32 %v598, %v602
        %v607 = vadd.f32 %v599, %v603
        %v608 = vadd.f32 %v600, %v604
        %vm609 = vcmask 519168
        %610 = vst.msk [vmem:[%s203] sm:$0xf] %vm609, %v605
        %611 = vst.msk [vmem:[%s203 + $0x4] sm:$0xf] %vm609, %v606
        %612 = vst.msk [vmem:[%s203 + $0x8] sm:$0xf] %vm609, %v607
        %613 = vst.msk [vmem:[%s203 + $0xc] sm:$0xf] %vm609, %v608
        %s614 = sand.u32 %s96, 1
        %s615 = scalar_lea.sflag [#allocation4], %s614
        %s616 = sand.u32 %s96, 1
        %s617 = smul.addr %s616, 16
        %s618 = scalar_lea.vmem [#allocation7], %s617
        // Predicated region
        $region37: #{tpu_custom_call.1} parent=27 // pred_check
          %p619 = pneg %p106
        $region38: #{tpu_custom_call.1} parent=27 // pred_check_branch
          %621 = sbr.rel (%p619) target = $region40
        $region39: #{tpu_custom_call.1} parent=27 // pred_region
          %s622 = smul.u32 4, %s24
          %s624 = ssub.s32 256, 256
          %625 = vsyncadd %s615, %s624
          %s626 = smul.addr %s25, 4
          %s627 = sadd.s32 %s622, %s626
          %s628 = smul.addr %s627, 64
          %s629 = scalar_lea.hbm %s2, %s628
          %s630 = sshll.u32 %s618, 4
          %s631 = int_to_ptr.vmem [resolvable:$true] %s630
          %636 = dma.vmem_to_hbm [thread:$0]  %s631, 256, %s629, %s615, 64, 64, 4
        $region40: #{tpu_custom_call.1} parent=27 // pred_fallthru
          _
      $region28: #{tpu_custom_call.1} parent=5 // pred_fallthru
        _
      %p637 = scmp.le.s32.totalorder 2, %s15
      // Predicated region
      $region41: #{tpu_custom_call.1} parent=5 // pred_check
        %p638 = pneg %p637
      $region42: #{tpu_custom_call.1} parent=5 // pred_check_branch
        %640 = sbr.rel (%p638) target = $region44
      $region43: #{tpu_custom_call.1} parent=5 // pred_region
        %s641 = ssub.s32 %s15, 2
        // Predicated region
        $region45: #{tpu_custom_call.1} parent=43 // pred_check
          %p642 = pneg %p112
        $region46: #{tpu_custom_call.1} parent=43 // pred_check_branch
          %644 = sbr.rel (%p642) target = $region48
        $region47: #{tpu_custom_call.1} parent=43 // pred_region
          %s645 = sand.u32 %s97, 1
          %s646 = scalar_lea.sflag [#allocation4], %s645
          %s647 = sand.u32 %s97, 1
          %s648 = smul.addr %s647, 16
          %s649 = scalar_lea.vmem [#allocation7], %s648
          %650 = dma.done %s646, 256
        $region48: #{tpu_custom_call.1} parent=43 // pred_fallthru
          _
      $region44: #{tpu_custom_call.1} parent=5 // pred_fallthru
        _
    $region6: #{tpu_custom_call.1} parent=1 // loop_footer
      %s19 = sadd.s32 1, %s15
    $region7: #{tpu_custom_call.1} parent=1 // loop_footer_branch
      %14 = sbr.rel target = $region3
    $region8: #{tpu_custom_call.1} parent=1 // loop_exit
      _
    %651 = vsyncpa [#allocation3], 1
    %s652 = scalar_lea.sflag [#allocation3], 1
    %653 = vsyncpa %s652, 1
    %654 = vsyncpa [#allocation6], 1
    %655 = vsyncpa [#allocation4], 1
    %s656 = scalar_lea.sflag [#allocation4], 1
    %657 = vsyncpa %s656, 1

</llo_original>
